<compile_context>
chip_gen: v5e
topology: v5e:2x2
jax: 0.10.0
libtpu: 0.0.40
codegen_flags: <defaults>
</compile_context>

<pallas_src>
import jax
import jax.numpy as jnp
from jax import lax
from jax.experimental import pallas as pl
from jax.experimental.pallas import tpu as pltpu

BETA = 0.8            # SNN(beta=0.8)
LIF_THRESHOLD = 1.0   # snntorch.Leaky default threshold


def _output_group(T, D_out):
    """Smallest group of time steps whose concatenated width is a full 128-lane
    multiple (so the grouped output store is unmasked). Falls back to T."""
    for g in range(1, T + 1):
        if T % g == 0 and (g * D_out) % 128 == 0:
            return g
    return T


def _make_snn_kernel(T, B, H, D_out):
    group = _output_group(T, D_out)

    def kernel(x_ref, w1_ref, b1_ref, w2_ref, b2_ref,
               spk_out_ref, mem_out_ref, spk1_scratch):
        # ---- (a) layer-1 current for ALL time steps at once ----------------
        # (T*B, D_in) @ (D_in, H) -> (T*B, H); bias folded in once.
        cur1_all = jnp.dot(x_ref[...], w1_ref[...],
                           preferred_element_type=jnp.float32) + b1_ref[...]

        # ---- (b) layer-1 LIF recurrence (elementwise only) ------------------
        mem1 = jnp.zeros((B, H), jnp.float32)       # init_leaky() -> zeros
        reset1 = jnp.zeros((B, H), jnp.float32)     # spk1_{-1} = 0
        for t in range(T):
            cur1 = cur1_all[t * B:(t + 1) * B, :]   # static slice
            mem1 = BETA * mem1 + cur1 - reset1
            spk1 = (mem1 > LIF_THRESHOLD).astype(jnp.float32)
            # B=8 rows == one sublane block, H lanes -> unmasked full-width store.
            spk1_scratch[t * B:(t + 1) * B, :] = spk1
            reset1 = spk1 if LIF_THRESHOLD == 1.0 else spk1 * LIF_THRESHOLD

        # ---- (c) layer-2 current for ALL time steps at once -----------------
        # Single M=T*B matmul instead of T tiny M=B matmuls on the serial chain.
        cur2_all = jnp.dot(spk1_scratch[...], w2_ref[...],
                           preferred_element_type=jnp.float32) + b2_ref[...]

        # ---- (d) layer-2 LIF recurrence + grouped lane-dense writeback -------
        mem2 = jnp.zeros((B, D_out), jnp.float32)
        reset2 = jnp.zeros((B, D_out), jnp.float32)
        spk_group, mem_group = [], []
        for t in range(T):
            cur2 = cur2_all[t * B:(t + 1) * B, :]
            mem2 = BETA * mem2 + cur2 - reset2
            spk2 = (mem2 > LIF_THRESHOLD).astype(jnp.float32)
            reset2 = spk2 if LIF_THRESHOLD == 1.0 else spk2 * LIF_THRESHOLD

            spk_group.append(spk2)
            mem_group.append(mem2)
            if (t + 1) % group == 0:
                # 128-lane (or full-width) group -> one unmasked store each,
                # then the group's live values are released.
                lo = (t + 1 - group) * D_out
                hi = (t + 1) * D_out
                spk_out_ref[:, lo:hi] = jnp.concatenate(spk_group, axis=1)
                mem_out_ref[:, lo:hi] = jnp.concatenate(mem_group, axis=1)
                spk_group, mem_group = [], []

    return kernel


def snn_forward(x, w1, b1, w2, b2):
    """x: (T, B, D_in) float32. Returns (spk_rec, mem_rec), each (T, B, D_out)."""
    T, B, D_in = x.shape
    H = w1.shape[1]
    D_out = w2.shape[1]

    # Zero-cost metadata reshape: fold time into the matmul M dimension.
    x2d = x.reshape(T * B, D_in)

    kernel = _make_snn_kernel(T, B, H, D_out)

    fsize = 4  # f32 bytes
    cost = pl.CostEstimate(
        flops=2 * T * B * D_in * H + 2 * T * B * H * D_out,
        transcendentals=0,
        bytes_accessed=(T * B * D_in + D_in * H + H + H * D_out + D_out
                        + 2 * B * T * D_out) * fsize,
    )

    spk_flat, mem_flat = pl.pallas_call(
        kernel,
        out_shape=(
            jax.ShapeDtypeStruct((B, T * D_out), jnp.float32),
            jax.ShapeDtypeStruct((B, T * D_out), jnp.float32),
        ),
        grid_spec=pltpu.PrefetchScalarGridSpec(
            num_scalar_prefetch=0,
            grid=(1,),  # single invocation: whole working set (<1 MiB) fits VMEM
            in_specs=[
                pl.BlockSpec((T * B, D_in), lambda i: (0, 0)),   # x (all steps)
                pl.BlockSpec((D_in, H),     lambda i: (0, 0)),   # W1
                pl.BlockSpec((1, H),        lambda i: (0, 0)),   # b1
                pl.BlockSpec((H, D_out),    lambda i: (0, 0)),   # W2
                pl.BlockSpec((1, D_out),    lambda i: (0, 0)),   # b2
            ],
            out_specs=[
                pl.BlockSpec((B, T * D_out), lambda i: (0, 0)),  # spk2 record
                pl.BlockSpec((B, T * D_out), lambda i: (0, 0)),  # mem2 record
            ],
            scratch_shapes=[
                pltpu.VMEM((T * B, H), jnp.float32),             # spk1 for all t
            ],
        ),
        compiler_params=pltpu.CompilerParams(
            dimension_semantics=("arbitrary",),
        ),
        cost_estimate=cost,
        # Per perf review: no batch-parallel grid axis at these sizes -- the
        # kernel is latency-bound; sharding across v7x's two TensorCores only
        # adds cross-core overhead.  Revisit (and re-budget against 64 MiB VMEM
        # per TC on v7x) only if B grows to ~256+.
    )(x2d, w1, b1, w2, b2)

    # (B, T*D_out) -> (B, T, D_out) -> (T, B, D_out), matching torch.stack(dim=0).
    spk_rec = jnp.transpose(spk_flat.reshape(B, T, D_out), (1, 0, 2))
    mem_rec = jnp.transpose(mem_flat.reshape(B, T, D_out), (1, 0, 2))
    return spk_rec, mem_rec


def _reference_snn(x, w1, b1, w2, b2):
    """Pure-JAX reference mirroring snntorch Leaky semantics, for validation."""
    B = x.shape[1]
    H = w1.shape[1]
    D_out = w2.shape[1]

    def step(carry, x_t):
        mem1, mem2 = carry
        cur1 = x_t @ w1 + b1[0]
        reset1 = (mem1 > LIF_THRESHOLD).astype(jnp.float32)
        mem1 = BETA * mem1 + cur1 - reset1 * LIF_THRESHOLD
        spk1 = (mem1 > LIF_THRESHOLD).astype(jnp.float32)

        cur2 = spk1 @ w2 + b2[0]
        reset2 = (mem2 > LIF_THRESHOLD).astype(jnp.float32)
        mem2 = BETA * mem2 + cur2 - reset2 * LIF_THRESHOLD
        spk2 = (mem2 > LIF_THRESHOLD).astype(jnp.float32)
        return (mem1, mem2), (spk2, mem2)

    init = (jnp.zeros((B, H), jnp.float32), jnp.zeros((B, D_out), jnp.float32))
    _, (spk_rec, mem_rec) = lax.scan(step, init, x)
    return spk_rec, mem_rec


if __name__ == "__main__":
    # Small shapes consistent with the module (layers=[D_in, H, D_out], time-major input).
    T, B = 8, 8
    D_in, H, D_out = 256, 512, 32

    key = jax.random.PRNGKey(0)
    k_x, k_w1, k_b1, k_w2, k_b2 = jax.random.split(key, 5)

    # Latency-coded spike input (0/1), like snntorch.spikegen.latency would produce.
    x = (jax.random.uniform(k_x, (T, B, D_in)) < 0.2).astype(jnp.float32)

    # Deterministic nn.Linear-style init: U(-1/sqrt(fan_in), 1/sqrt(fan_in)).
    bound1 = 1.0 / jnp.sqrt(D_in)
    w1 = jax.random.uniform(k_w1, (D_in, H), minval=-bound1, maxval=bound1).astype(jnp.float32)
    b1 = jax.random.uniform(k_b1, (1, H), minval=-bound1, maxval=bound1).astype(jnp.float32)
    bound2 = 1.0 / jnp.sqrt(H)
    w2 = jax.random.uniform(k_w2, (H, D_out), minval=-bound2, maxval=bound2).astype(jnp.float32)
    b2 = jax.random.uniform(k_b2, (1, D_out), minval=-bound2, maxval=bound2).astype(jnp.float32)

    spk_rec, mem_rec = snn_forward(x, w1, b1, w2, b2)
    jax.block_until_ready((spk_rec, mem_rec))

    # Validate against a pure-JAX reference of the same forward.
    spk_ref, mem_ref = _reference_snn(x, w1, b1, w2, b2)
    assert spk_rec.shape == (T, B, D_out) and mem_rec.shape == (T, B, D_out)

    # Membrane potentials: numeric tolerance (MXU accumulation order differs).
    assert jnp.allclose(mem_rec, mem_ref, atol=1e-4), "membrane record mismatch"
    # Spikes: strict > against the threshold can flip for borderline membrane
    # values; only flag mismatches that are NOT near the threshold.
    spk_mismatch = spk_rec != spk_ref
    near_thr = jnp.abs(mem_ref - LIF_THRESHOLD) < 1e-4
    assert bool(jnp.all(jnp.logical_or(~spk_mismatch, near_thr))), \
        "spike record mismatch away from threshold"

    print("KERNEL_OK")
</pallas_src>

<mosaic_0001>
module attributes {stable_mosaic.version = 11 : i64} {
  func.func @kernel(%arg0: i32, %arg1: memref<64x256xf32, #tpu.memory_space<vmem>>, %arg2: memref<256x512xf32, #tpu.memory_space<vmem>>, %arg3: memref<1x512xf32, #tpu.memory_space<vmem>>, %arg4: memref<512x32xf32, #tpu.memory_space<vmem>>, %arg5: memref<1x32xf32, #tpu.memory_space<vmem>>, %arg6: memref<8x256xf32, #tpu.memory_space<vmem>>, %arg7: memref<8x256xf32, #tpu.memory_space<vmem>>, %arg8: memref<64x512xf32, #tpu.memory_space<vmem>>) attributes {dimension_semantics = [#tpu.dimension_semantics<arbitrary>], iteration_bounds = array<i64: 1>, scalar_prefetch = 0 : i64, scratch_operands = 1 : i64, tpu.core_type = #tpu.core_type<tc>, window_params = [{pipeline_mode = #tpu.pipeline_mode<synchronous>, transform_indices = @transform_0, window_bounds = array<i64: 64, 256>}, {pipeline_mode = #tpu.pipeline_mode<synchronous>, transform_indices = @transform_1, window_bounds = array<i64: 256, 512>}, {pipeline_mode = #tpu.pipeline_mode<synchronous>, transform_indices = @transform_2, window_bounds = array<i64: 1, 512>}, {pipeline_mode = #tpu.pipeline_mode<synchronous>, transform_indices = @transform_3, window_bounds = array<i64: 512, 32>}, {pipeline_mode = #tpu.pipeline_mode<synchronous>, transform_indices = @transform_4, window_bounds = array<i64: 1, 32>}, {pipeline_mode = #tpu.pipeline_mode<synchronous>, transform_indices = @transform_5, window_bounds = array<i64: 8, 256>}, {pipeline_mode = #tpu.pipeline_mode<synchronous>, transform_indices = @transform_6, window_bounds = array<i64: 8, 256>}]} {
    %c0 = arith.constant 0 : index
    %c0_0 = arith.constant 0 : index
    %0 = vector.load %arg1[%c0, %c0_0] : memref<64x256xf32, #tpu.memory_space<vmem>>, vector<64x256xf32>
    %c0_1 = arith.constant 0 : index
    %c0_2 = arith.constant 0 : index
    %1 = vector.load %arg2[%c0_1, %c0_2] : memref<256x512xf32, #tpu.memory_space<vmem>>, vector<256x512xf32>
    %cst = arith.constant dense<0.000000e+00> : vector<64x512xf32>
    %2 = tpu.matmul %0, %1, %cst {dimension_numbers = #tpu.dot_dimension_numbers<[1], [0], [0], [1], [0, 0, 1, 1], [], []>} : vector<64x256xf32>, vector<256x512xf32>, vector<64x512xf32> -> vector<64x512xf32>
    %c0_3 = arith.constant 0 : index
    %c0_4 = arith.constant 0 : index
    %3 = vector.load %arg3[%c0_3, %c0_4] : memref<1x512xf32, #tpu.memory_space<vmem>>, vector<1x512xf32>
    %4 = vector.broadcast %3 : vector<1x512xf32> to vector<64x512xf32>
    %5 = arith.addf %2, %4 : vector<64x512xf32>
    %cst_5 = arith.constant 0.000000e+00 : f32
    %6 = vector.broadcast %cst_5 : f32 to vector<8x512xf32>
    %cst_6 = arith.constant 0.000000e+00 : f32
    %7 = vector.broadcast %cst_6 : f32 to vector<8x512xf32>
    %8 = vector.extract_strided_slice %5 {offsets = [0, 0], sizes = [8, 512], strides = [1, 1]} : vector<64x512xf32> to vector<8x512xf32>
    %cst_7 = arith.constant 8.000000e-01 : f32
    %9 = vector.broadcast %cst_7 : f32 to vector<8x512xf32>
    %10 = arith.mulf %9, %6 : vector<8x512xf32>
    %11 = arith.addf %10, %8 : vector<8x512xf32>
    %12 = arith.subf %11, %7 : vector<8x512xf32>
    %cst_8 = arith.constant 1.000000e+00 : f32
    %13 = vector.broadcast %cst_8 : f32 to vector<8x512xf32>
    %14 = arith.cmpf ogt, %12, %13 : vector<8x512xf32>
    %15 = arith.extui %14 : vector<8x512xi1> to vector<8x512xi32>
    %16 = arith.sitofp %15 : vector<8x512xi32> to vector<8x512xf32>
    %c0_9 = arith.constant 0 : index
    %c0_10 = arith.constant 0 : index
    %17 = vector.load %arg8[%c0_9, %c0_10] : memref<64x512xf32, #tpu.memory_space<vmem>>, vector<8x512xf32>
    tpu.vector_store %arg8[%c0_9, %c0_10], %16 {strides = array<i32>} : memref<64x512xf32, #tpu.memory_space<vmem>>, vector<8x512xf32>,
    %18 = vector.extract_strided_slice %5 {offsets = [8, 0], sizes = [8, 512], strides = [1, 1]} : vector<64x512xf32> to vector<8x512xf32>
    %cst_11 = arith.constant 8.000000e-01 : f32
    %19 = vector.broadcast %cst_11 : f32 to vector<8x512xf32>
    %20 = arith.mulf %19, %12 : vector<8x512xf32>
    %21 = arith.addf %20, %18 : vector<8x512xf32>
    %22 = arith.subf %21, %16 : vector<8x512xf32>
    %cst_12 = arith.constant 1.000000e+00 : f32
    %23 = vector.broadcast %cst_12 : f32 to vector<8x512xf32>
    %24 = arith.cmpf ogt, %22, %23 : vector<8x512xf32>
    %25 = arith.extui %24 : vector<8x512xi1> to vector<8x512xi32>
    %26 = arith.sitofp %25 : vector<8x512xi32> to vector<8x512xf32>
    %c8 = arith.constant 8 : index
    %c0_13 = arith.constant 0 : index
    %27 = vector.load %arg8[%c8, %c0_13] : memref<64x512xf32, #tpu.memory_space<vmem>>, vector<8x512xf32>
    tpu.vector_store %arg8[%c8, %c0_13], %26 {strides = array<i32>} : memref<64x512xf32, #tpu.memory_space<vmem>>, vector<8x512xf32>,
    %28 = vector.extract_strided_slice %5 {offsets = [16, 0], sizes = [8, 512], strides = [1, 1]} : vector<64x512xf32> to vector<8x512xf32>
    %cst_14 = arith.constant 8.000000e-01 : f32
    %29 = vector.broadcast %cst_14 : f32 to vector<8x512xf32>
    %30 = arith.mulf %29, %22 : vector<8x512xf32>
    %31 = arith.addf %30, %28 : vector<8x512xf32>
    %32 = arith.subf %31, %26 : vector<8x512xf32>
    %cst_15 = arith.constant 1.000000e+00 : f32
    %33 = vector.broadcast %cst_15 : f32 to vector<8x512xf32>
    %34 = arith.cmpf ogt, %32, %33 : vector<8x512xf32>
    %35 = arith.extui %34 : vector<8x512xi1> to vector<8x512xi32>
    %36 = arith.sitofp %35 : vector<8x512xi32> to vector<8x512xf32>
    %c16 = arith.constant 16 : index
    %c0_16 = arith.constant 0 : index
    %37 = vector.load %arg8[%c16, %c0_16] : memref<64x512xf32, #tpu.memory_space<vmem>>, vector<8x512xf32>
    tpu.vector_store %arg8[%c16, %c0_16], %36 {strides = array<i32>} : memref<64x512xf32, #tpu.memory_space<vmem>>, vector<8x512xf32>,
    %38 = vector.extract_strided_slice %5 {offsets = [24, 0], sizes = [8, 512], strides = [1, 1]} : vector<64x512xf32> to vector<8x512xf32>
    %cst_17 = arith.constant 8.000000e-01 : f32
    %39 = vector.broadcast %cst_17 : f32 to vector<8x512xf32>
    %40 = arith.mulf %39, %32 : vector<8x512xf32>
    %41 = arith.addf %40, %38 : vector<8x512xf32>
    %42 = arith.subf %41, %36 : vector<8x512xf32>
    %cst_18 = arith.constant 1.000000e+00 : f32
    %43 = vector.broadcast %cst_18 : f32 to vector<8x512xf32>
    %44 = arith.cmpf ogt, %42, %43 : vector<8x512xf32>
    %45 = arith.extui %44 : vector<8x512xi1> to vector<8x512xi32>
    %46 = arith.sitofp %45 : vector<8x512xi32> to vector<8x512xf32>
    %c24 = arith.constant 24 : index
    %c0_19 = arith.constant 0 : index
    %47 = vector.load %arg8[%c24, %c0_19] : memref<64x512xf32, #tpu.memory_space<vmem>>, vector<8x512xf32>
    tpu.vector_store %arg8[%c24, %c0_19], %46 {strides = array<i32>} : memref<64x512xf32, #tpu.memory_space<vmem>>, vector<8x512xf32>,
    %48 = vector.extract_strided_slice %5 {offsets = [32, 0], sizes = [8, 512], strides = [1, 1]} : vector<64x512xf32> to vector<8x512xf32>
    %cst_20 = arith.constant 8.000000e-01 : f32
    %49 = vector.broadcast %cst_20 : f32 to vector<8x512xf32>
    %50 = arith.mulf %49, %42 : vector<8x512xf32>
    %51 = arith.addf %50, %48 : vector<8x512xf32>
    %52 = arith.subf %51, %46 : vector<8x512xf32>
    %cst_21 = arith.constant 1.000000e+00 : f32
    %53 = vector.broadcast %cst_21 : f32 to vector<8x512xf32>
    %54 = arith.cmpf ogt, %52, %53 : vector<8x512xf32>
    %55 = arith.extui %54 : vector<8x512xi1> to vector<8x512xi32>
    %56 = arith.sitofp %55 : vector<8x512xi32> to vector<8x512xf32>
    %c32 = arith.constant 32 : index
    %c0_22 = arith.constant 0 : index
    %57 = vector.load %arg8[%c32, %c0_22] : memref<64x512xf32, #tpu.memory_space<vmem>>, vector<8x512xf32>
    tpu.vector_store %arg8[%c32, %c0_22], %56 {strides = array<i32>} : memref<64x512xf32, #tpu.memory_space<vmem>>, vector<8x512xf32>,
    %58 = vector.extract_strided_slice %5 {offsets = [40, 0], sizes = [8, 512], strides = [1, 1]} : vector<64x512xf32> to vector<8x512xf32>
    %cst_23 = arith.constant 8.000000e-01 : f32
    %59 = vector.broadcast %cst_23 : f32 to vector<8x512xf32>
    %60 = arith.mulf %59, %52 : vector<8x512xf32>
    %61 = arith.addf %60, %58 : vector<8x512xf32>
    %62 = arith.subf %61, %56 : vector<8x512xf32>
    %cst_24 = arith.constant 1.000000e+00 : f32
    %63 = vector.broadcast %cst_24 : f32 to vector<8x512xf32>
    %64 = arith.cmpf ogt, %62, %63 : vector<8x512xf32>
    %65 = arith.extui %64 : vector<8x512xi1> to vector<8x512xi32>
    %66 = arith.sitofp %65 : vector<8x512xi32> to vector<8x512xf32>
    %c40 = arith.constant 40 : index
    %c0_25 = arith.constant 0 : index
    %67 = vector.load %arg8[%c40, %c0_25] : memref<64x512xf32, #tpu.memory_space<vmem>>, vector<8x512xf32>
    tpu.vector_store %arg8[%c40, %c0_25], %66 {strides = array<i32>} : memref<64x512xf32, #tpu.memory_space<vmem>>, vector<8x512xf32>,
    %68 = vector.extract_strided_slice %5 {offsets = [48, 0], sizes = [8, 512], strides = [1, 1]} : vector<64x512xf32> to vector<8x512xf32>
    %cst_26 = arith.constant 8.000000e-01 : f32
    %69 = vector.broadcast %cst_26 : f32 to vector<8x512xf32>
    %70 = arith.mulf %69, %62 : vector<8x512xf32>
    %71 = arith.addf %70, %68 : vector<8x512xf32>
    %72 = arith.subf %71, %66 : vector<8x512xf32>
    %cst_27 = arith.constant 1.000000e+00 : f32
    %73 = vector.broadcast %cst_27 : f32 to vector<8x512xf32>
    %74 = arith.cmpf ogt, %72, %73 : vector<8x512xf32>
    %75 = arith.extui %74 : vector<8x512xi1> to vector<8x512xi32>
    %76 = arith.sitofp %75 : vector<8x512xi32> to vector<8x512xf32>
    %c48 = arith.constant 48 : index
    %c0_28 = arith.constant 0 : index
    %77 = vector.load %arg8[%c48, %c0_28] : memref<64x512xf32, #tpu.memory_space<vmem>>, vector<8x512xf32>
    tpu.vector_store %arg8[%c48, %c0_28], %76 {strides = array<i32>} : memref<64x512xf32, #tpu.memory_space<vmem>>, vector<8x512xf32>,
    %78 = vector.extract_strided_slice %5 {offsets = [56, 0], sizes = [8, 512], strides = [1, 1]} : vector<64x512xf32> to vector<8x512xf32>
    %cst_29 = arith.constant 8.000000e-01 : f32
    %79 = vector.broadcast %cst_29 : f32 to vector<8x512xf32>
    %80 = arith.mulf %79, %72 : vector<8x512xf32>
    %81 = arith.addf %80, %78 : vector<8x512xf32>
    %82 = arith.subf %81, %76 : vector<8x512xf32>
    %cst_30 = arith.constant 1.000000e+00 : f32
    %83 = vector.broadcast %cst_30 : f32 to vector<8x512xf32>
    %84 = arith.cmpf ogt, %82, %83 : vector<8x512xf32>
    %85 = arith.extui %84 : vector<8x512xi1> to vector<8x512xi32>
    %86 = arith.sitofp %85 : vector<8x512xi32> to vector<8x512xf32>
    %c56 = arith.constant 56 : index
    %c0_31 = arith.constant 0 : index
    %87 = vector.load %arg8[%c56, %c0_31] : memref<64x512xf32, #tpu.memory_space<vmem>>, vector<8x512xf32>
    tpu.vector_store %arg8[%c56, %c0_31], %86 {strides = array<i32>} : memref<64x512xf32, #tpu.memory_space<vmem>>, vector<8x512xf32>,
    %c0_32 = arith.constant 0 : index
    %c0_33 = arith.constant 0 : index
    %88 = vector.load %arg8[%c0_32, %c0_33] : memref<64x512xf32, #tpu.memory_space<vmem>>, vector<64x512xf32>
    %c0_34 = arith.constant 0 : index
    %c0_35 = arith.constant 0 : index
    %89 = vector.load %arg4[%c0_34, %c0_35] : memref<512x32xf32, #tpu.memory_space<vmem>>, vector<512x32xf32>
    %cst_36 = arith.constant dense<0.000000e+00> : vector<64x32xf32>
    %90 = tpu.matmul %88, %89, %cst_36 {dimension_numbers = #tpu.dot_dimension_numbers<[1], [0], [0], [1], [0, 0, 1, 1], [], []>} : vector<64x512xf32>, vector<512x32xf32>, vector<64x32xf32> -> vector<64x32xf32>
    %c0_37 = arith.constant 0 : index
    %c0_38 = arith.constant 0 : index
    %91 = vector.load %arg5[%c0_37, %c0_38] : memref<1x32xf32, #tpu.memory_space<vmem>>, vector<1x32xf32>
    %92 = vector.broadcast %91 : vector<1x32xf32> to vector<64x32xf32>
    %93 = arith.addf %90, %92 : vector<64x32xf32>
    %cst_39 = arith.constant 0.000000e+00 : f32
    %94 = vector.broadcast %cst_39 : f32 to vector<8x32xf32>
    %cst_40 = arith.constant 0.000000e+00 : f32
    %95 = vector.broadcast %cst_40 : f32 to vector<8x32xf32>
    %96 = vector.extract_strided_slice %93 {offsets = [0, 0], sizes = [8, 32], strides = [1, 1]} : vector<64x32xf32> to vector<8x32xf32>
    %cst_41 = arith.constant 8.000000e-01 : f32
    %97 = vector.broadcast %cst_41 : f32 to vector<8x32xf32>
    %98 = arith.mulf %97, %94 : vector<8x32xf32>
    %99 = arith.addf %98, %96 : vector<8x32xf32>
    %100 = arith.subf %99, %95 : vector<8x32xf32>
    %cst_42 = arith.constant 1.000000e+00 : f32
    %101 = vector.broadcast %cst_42 : f32 to vector<8x32xf32>
    %102 = arith.cmpf ogt, %100, %101 : vector<8x32xf32>
    %103 = arith.extui %102 : vector<8x32xi1> to vector<8x32xi32>
    %104 = arith.sitofp %103 : vector<8x32xi32> to vector<8x32xf32>
    %105 = vector.extract_strided_slice %93 {offsets = [8, 0], sizes = [8, 32], strides = [1, 1]} : vector<64x32xf32> to vector<8x32xf32>
    %cst_43 = arith.constant 8.000000e-01 : f32
    %106 = vector.broadcast %cst_43 : f32 to vector<8x32xf32>
    %107 = arith.mulf %106, %100 : vector<8x32xf32>
    %108 = arith.addf %107, %105 : vector<8x32xf32>
    %109 = arith.subf %108, %104 : vector<8x32xf32>
    %cst_44 = arith.constant 1.000000e+00 : f32
    %110 = vector.broadcast %cst_44 : f32 to vector<8x32xf32>
    %111 = arith.cmpf ogt, %109, %110 : vector<8x32xf32>
    %112 = arith.extui %111 : vector<8x32xi1> to vector<8x32xi32>
    %113 = arith.sitofp %112 : vector<8x32xi32> to vector<8x32xf32>
    %114 = vector.extract_strided_slice %93 {offsets = [16, 0], sizes = [8, 32], strides = [1, 1]} : vector<64x32xf32> to vector<8x32xf32>
    %cst_45 = arith.constant 8.000000e-01 : f32
    %115 = vector.broadcast %cst_45 : f32 to vector<8x32xf32>
    %116 = arith.mulf %115, %109 : vector<8x32xf32>
    %117 = arith.addf %116, %114 : vector<8x32xf32>
    %118 = arith.subf %117, %113 : vector<8x32xf32>
    %cst_46 = arith.constant 1.000000e+00 : f32
    %119 = vector.broadcast %cst_46 : f32 to vector<8x32xf32>
    %120 = arith.cmpf ogt, %118, %119 : vector<8x32xf32>
    %121 = arith.extui %120 : vector<8x32xi1> to vector<8x32xi32>
    %122 = arith.sitofp %121 : vector<8x32xi32> to vector<8x32xf32>
    %123 = vector.extract_strided_slice %93 {offsets = [24, 0], sizes = [8, 32], strides = [1, 1]} : vector<64x32xf32> to vector<8x32xf32>
    %cst_47 = arith.constant 8.000000e-01 : f32
    %124 = vector.broadcast %cst_47 : f32 to vector<8x32xf32>
    %125 = arith.mulf %124, %118 : vector<8x32xf32>
    %126 = arith.addf %125, %123 : vector<8x32xf32>
    %127 = arith.subf %126, %122 : vector<8x32xf32>
    %cst_48 = arith.constant 1.000000e+00 : f32
    %128 = vector.broadcast %cst_48 : f32 to vector<8x32xf32>
    %129 = arith.cmpf ogt, %127, %128 : vector<8x32xf32>
    %130 = arith.extui %129 : vector<8x32xi1> to vector<8x32xi32>
    %131 = arith.sitofp %130 : vector<8x32xi32> to vector<8x32xf32>
    %132 = tpu.concatenate %104, %113, %122, %131 in 1 : vector<8x32xf32>, vector<8x32xf32>, vector<8x32xf32>, vector<8x32xf32> -> vector<8x128xf32>
    %c0_49 = arith.constant 0 : index
    %c0_50 = arith.constant 0 : index
    %133 = vector.load %arg6[%c0_49, %c0_50] : memref<8x256xf32, #tpu.memory_space<vmem>>, vector<8x128xf32>
    tpu.vector_store %arg6[%c0_49, %c0_50], %132 {strides = array<i32>} : memref<8x256xf32, #tpu.memory_space<vmem>>, vector<8x128xf32>,
    %134 = tpu.concatenate %100, %109, %118, %127 in 1 : vector<8x32xf32>, vector<8x32xf32>, vector<8x32xf32>, vector<8x32xf32> -> vector<8x128xf32>
    %c0_51 = arith.constant 0 : index
    %c0_52 = arith.constant 0 : index
    %135 = vector.load %arg7[%c0_51, %c0_52] : memref<8x256xf32, #tpu.memory_space<vmem>>, vector<8x128xf32>
    tpu.vector_store %arg7[%c0_51, %c0_52], %134 {strides = array<i32>} : memref<8x256xf32, #tpu.memory_space<vmem>>, vector<8x128xf32>,
    %136 = vector.extract_strided_slice %93 {offsets = [32, 0], sizes = [8, 32], strides = [1, 1]} : vector<64x32xf32> to vector<8x32xf32>
    %cst_53 = arith.constant 8.000000e-01 : f32
    %137 = vector.broadcast %cst_53 : f32 to vector<8x32xf32>
    %138 = arith.mulf %137, %127 : vector<8x32xf32>
    %139 = arith.addf %138, %136 : vector<8x32xf32>
    %140 = arith.subf %139, %131 : vector<8x32xf32>
    %cst_54 = arith.constant 1.000000e+00 : f32
    %141 = vector.broadcast %cst_54 : f32 to vector<8x32xf32>
    %142 = arith.cmpf ogt, %140, %141 : vector<8x32xf32>
    %143 = arith.extui %142 : vector<8x32xi1> to vector<8x32xi32>
    %144 = arith.sitofp %143 : vector<8x32xi32> to vector<8x32xf32>
    %145 = vector.extract_strided_slice %93 {offsets = [40, 0], sizes = [8, 32], strides = [1, 1]} : vector<64x32xf32> to vector<8x32xf32>
    %cst_55 = arith.constant 8.000000e-01 : f32
    %146 = vector.broadcast %cst_55 : f32 to vector<8x32xf32>
    %147 = arith.mulf %146, %140 : vector<8x32xf32>
    %148 = arith.addf %147, %145 : vector<8x32xf32>
    %149 = arith.subf %148, %144 : vector<8x32xf32>
    %cst_56 = arith.constant 1.000000e+00 : f32
    %150 = vector.broadcast %cst_56 : f32 to vector<8x32xf32>
    %151 = arith.cmpf ogt, %149, %150 : vector<8x32xf32>
    %152 = arith.extui %151 : vector<8x32xi1> to vector<8x32xi32>
    %153 = arith.sitofp %152 : vector<8x32xi32> to vector<8x32xf32>
    %154 = vector.extract_strided_slice %93 {offsets = [48, 0], sizes = [8, 32], strides = [1, 1]} : vector<64x32xf32> to vector<8x32xf32>
    %cst_57 = arith.constant 8.000000e-01 : f32
    %155 = vector.broadcast %cst_57 : f32 to vector<8x32xf32>
    %156 = arith.mulf %155, %149 : vector<8x32xf32>
    %157 = arith.addf %156, %154 : vector<8x32xf32>
    %158 = arith.subf %157, %153 : vector<8x32xf32>
    %cst_58 = arith.constant 1.000000e+00 : f32
    %159 = vector.broadcast %cst_58 : f32 to vector<8x32xf32>
    %160 = arith.cmpf ogt, %158, %159 : vector<8x32xf32>
    %161 = arith.extui %160 : vector<8x32xi1> to vector<8x32xi32>
    %162 = arith.sitofp %161 : vector<8x32xi32> to vector<8x32xf32>
    %163 = vector.extract_strided_slice %93 {offsets = [56, 0], sizes = [8, 32], strides = [1, 1]} : vector<64x32xf32> to vector<8x32xf32>
    %cst_59 = arith.constant 8.000000e-01 : f32
    %164 = vector.broadcast %cst_59 : f32 to vector<8x32xf32>
    %165 = arith.mulf %164, %158 : vector<8x32xf32>
    %166 = arith.addf %165, %163 : vector<8x32xf32>
    %167 = arith.subf %166, %162 : vector<8x32xf32>
    %cst_60 = arith.constant 1.000000e+00 : f32
    %168 = vector.broadcast %cst_60 : f32 to vector<8x32xf32>
    %169 = arith.cmpf ogt, %167, %168 : vector<8x32xf32>
    %170 = arith.extui %169 : vector<8x32xi1> to vector<8x32xi32>
    %171 = arith.sitofp %170 : vector<8x32xi32> to vector<8x32xf32>
    %172 = tpu.concatenate %144, %153, %162, %171 in 1 : vector<8x32xf32>, vector<8x32xf32>, vector<8x32xf32>, vector<8x32xf32> -> vector<8x128xf32>
    %c0_61 = arith.constant 0 : index
    %c128 = arith.constant 128 : index
    %173 = vector.load %arg6[%c0_61, %c128] : memref<8x256xf32, #tpu.memory_space<vmem>>, vector<8x128xf32>
    tpu.vector_store %arg6[%c0_61, %c128], %172 {strides = array<i32>} : memref<8x256xf32, #tpu.memory_space<vmem>>, vector<8x128xf32>,
    %174 = tpu.concatenate %140, %149, %158, %167 in 1 : vector<8x32xf32>, vector<8x32xf32>, vector<8x32xf32>, vector<8x32xf32> -> vector<8x128xf32>
    %c0_62 = arith.constant 0 : index
    %c128_63 = arith.constant 128 : index
    %175 = vector.load %arg7[%c0_62, %c128_63] : memref<8x256xf32, #tpu.memory_space<vmem>>, vector<8x128xf32>
    tpu.vector_store %arg7[%c0_62, %c128_63], %174 {strides = array<i32>} : memref<8x256xf32, #tpu.memory_space<vmem>>, vector<8x128xf32>,
    return
  }
  func.func @transform_0(%arg0: i32) -> (i32, i32) {
    %c0_i32 = arith.constant 0 : i32
    %c0_i32_0 = arith.constant 0 : i32
    %c0_i32_1 = arith.constant 0 : i32
    return %c0_i32, %c0_i32_0 : i32, i32
  }
  func.func @transform_1(%arg0: i32) -> (i32, i32) {
    %c0_i32 = arith.constant 0 : i32
    %c0_i32_0 = arith.constant 0 : i32
    %c0_i32_1 = arith.constant 0 : i32
    return %c0_i32, %c0_i32_0 : i32, i32
  }
  func.func @transform_2(%arg0: i32) -> (i32, i32) {
    %c0_i32 = arith.constant 0 : i32
    %c0_i32_0 = arith.constant 0 : i32
    %c0_i32_1 = arith.constant 0 : i32
    return %c0_i32, %c0_i32_0 : i32, i32
  }
  func.func @transform_3(%arg0: i32) -> (i32, i32) {
    %c0_i32 = arith.constant 0 : i32
    %c0_i32_0 = arith.constant 0 : i32
    %c0_i32_1 = arith.constant 0 : i32
    return %c0_i32, %c0_i32_0 : i32, i32
  }
  func.func @transform_4(%arg0: i32) -> (i32, i32) {
    %c0_i32 = arith.constant 0 : i32
    %c0_i32_0 = arith.constant 0 : i32
    %c0_i32_1 = arith.constant 0 : i32
    return %c0_i32, %c0_i32_0 : i32, i32
  }
  func.func @transform_5(%arg0: i32) -> (i32, i32) {
    %c0_i32 = arith.constant 0 : i32
    %c0_i32_0 = arith.constant 0 : i32
    %c0_i32_1 = arith.constant 0 : i32
    return %c0_i32, %c0_i32_0 : i32, i32
  }
  func.func @transform_6(%arg0: i32) -> (i32, i32) {
    %c0_i32 = arith.constant 0 : i32
    %c0_i32_0 = arith.constant 0 : i32
    %c0_i32_1 = arith.constant 0 : i32
    return %c0_i32, %c0_i32_0 : i32, i32
  }
}

</mosaic_0001>

<llo_original>
// kernel: tpu_custom_call.1
$region0: #{tpu_custom_call.1}
  #allocation0 [shape = 'u32[]', space=smem, size = 0x4, offset = 0x4, fixed_abs, tag = 'smem constant byte address 0x4 - core index']
  #allocation1 [shape = 'u32[72,128]{1,0:T(1,128)}', space=vmem, size = 0x9000, scoped, tag = 'internal scratch']
  #allocation2 [shape = 'f32[64,512]{1,0:T(8,128)}', space=vmem, size = 0x20000, scoped, tag = 'scratch operand']
  %s0 = inlined_call_operand.vmem [shape: f32[64,256], index: 0, kind: input, shape index: {}]
  %s1 = inlined_call_operand.hbm [shape: f32[256,512], index: 1, kind: input, shape index: {}]
  %s2 = inlined_call_operand.vmem [shape: f32[1,512], index: 2, kind: input, shape index: {}]
  %s3 = inlined_call_operand.vmem [shape: f32[512,32], index: 3, kind: input, shape index: {}]
  %s4 = inlined_call_operand.vmem [shape: f32[1,32], index: 4, kind: input, shape index: {}]
  %s5 = inlined_call_operand.hbm [shape: f32[8,256], index: 5, kind: output, shape index: {0}]
  %s6 = inlined_call_operand.hbm [shape: f32[8,256], index: 6, kind: output, shape index: {1}]
  %7 = xla_tuple %s5, %s6
  %s8 = sld [smem:[#allocation0]]
  $region42: #{tpu_custom_call.1} parent=0
    _
  %s10 = ssub.s32 1, %s8
  %s11 = scalar_select 0, %s10, %s8
  $region1: #{tpu_custom_call.1} parent=0
    #allocation3 [shape = 'u8[524288]{0}', space=vmem, size = 0x80000, scoped, tag = 'input window, operand 1, single buffered']
    #allocation4 [shape = 's32[1]{0}', space=sflag, size = 0x4, scoped, tag = 'scoped memory for tpu_custom_call.1']
    #allocation5 [shape = 's32[1]{0}', space=sflag, size = 0x4, scoped, tag = 'scoped memory for tpu_custom_call.1']
    #allocation6 [shape = 'u8[8192]{0}', space=vmem, size = 0x2000, scoped, tag = 'output window, operand 0, single buffered']
    #allocation7 [shape = 'u8[8192]{0}', space=vmem, size = 0x2000, scoped, tag = 'output window, operand 1, single buffered']
    #allocation8 [shape = 's32[1]{0}', space=sflag, size = 0x4, scoped, tag = 'scoped memory for tpu_custom_call.1']
    %12 = vsyncpa [#allocation4], 0
    %13 = vsyncpa [#allocation5], 0
    %14 = vsyncpa [#allocation8], 0
    // Predicated region
    $region2: #{tpu_custom_call.1} parent=1 // pred_check
      _
    $region3: #{tpu_custom_call.1} parent=1 // pred_check_branch
      %16 = sbr.rel (0) target = $region5
    $region4: #{tpu_custom_call.1} parent=1 // pred_region
      _
    $region5: #{tpu_custom_call.1} parent=1 // pred_fallthru
      _
    // Predicated region
    $region6: #{tpu_custom_call.1} parent=1 // pred_check
      _
    $region7: #{tpu_custom_call.1} parent=1 // pred_check_branch
      %18 = sbr.rel (0) target = $region9
    $region8: #{tpu_custom_call.1} parent=1 // pred_region
      %20 = vsyncadd [#allocation4], 0
      %s21 = sshll.u32 %s1, 4
      %s22 = int_to_ptr.hbm [resolvable:$true] %s21
      %s23 = sshll.u32 [#allocation3], 4
      %s24 = int_to_ptr.vmem [resolvable:$true] %s23
      %29 = dma.hbm_to_vmem [thread:$0]  %s22, 16384, %s24, [#allocation4], 512, 512, 32
    $region9: #{tpu_custom_call.1} parent=1 // pred_fallthru
      _
    // Predicated region
    $region10: #{tpu_custom_call.1} parent=1 // pred_check
      _
    $region11: #{tpu_custom_call.1} parent=1 // pred_check_branch
      %31 = sbr.rel (0) target = $region13
    $region12: #{tpu_custom_call.1} parent=1 // pred_region
      _
    $region13: #{tpu_custom_call.1} parent=1 // pred_fallthru
      _
    // Predicated region
    $region14: #{tpu_custom_call.1} parent=1 // pred_check
      _
    $region15: #{tpu_custom_call.1} parent=1 // pred_check_branch
      %33 = sbr.rel (0) target = $region17
    $region16: #{tpu_custom_call.1} parent=1 // pred_region
      _
    $region17: #{tpu_custom_call.1} parent=1 // pred_fallthru
      _
    // Predicated region
    $region18: #{tpu_custom_call.1} parent=1 // pred_check
      _
    $region19: #{tpu_custom_call.1} parent=1 // pred_check_branch
      %35 = sbr.rel (0) target = $region21
    $region20: #{tpu_custom_call.1} parent=1 // pred_region
      _
    $region21: #{tpu_custom_call.1} parent=1 // pred_fallthru
      _
    // Predicated region
    $region22: #{tpu_custom_call.1} parent=1 // pred_check
      _
    $region23: #{tpu_custom_call.1} parent=1 // pred_check_branch
      %37 = sbr.rel (0) target = $region25
    $region24: #{tpu_custom_call.1} parent=1 // pred_region
      %39 = dma.done [#allocation4], 16384
    $region25: #{tpu_custom_call.1} parent=1 // pred_fallthru
      _
    %v40 = vld [vmem:[%s0] sm:$0xff]
    %v41 = vld [vmem:[%s0 + $0x8] sm:$0xff]
    %v42 = vld [vmem:[%s0 + $0x10] sm:$0xff]
    %v43 = vld [vmem:[%s0 + $0x18] sm:$0xff]
    %v44 = vld [vmem:[%s0 + $0x20] sm:$0xff]
    %v45 = vld [vmem:[%s0 + $0x28] sm:$0xff]
    %v46 = vld [vmem:[%s0 + $0x30] sm:$0xff]
    %v47 = vld [vmem:[%s0 + $0x38] sm:$0xff]
    %v48 = vld [vmem:[%s0 + $0x40] sm:$0xff]
    %v49 = vld [vmem:[%s0 + $0x48] sm:$0xff]
    %v50 = vld [vmem:[%s0 + $0x50] sm:$0xff]
    %v51 = vld [vmem:[%s0 + $0x58] sm:$0xff]
    %v52 = vld [vmem:[%s0 + $0x60] sm:$0xff]
    %v53 = vld [vmem:[%s0 + $0x68] sm:$0xff]
    %v54 = vld [vmem:[%s0 + $0x70] sm:$0xff]
    %v55 = vld [vmem:[%s0 + $0x78] sm:$0xff]
    %v56 = vld [vmem:[#allocation3] sm:$0xff]
    %v57 = vld [vmem:[#allocation3 + $0x8] sm:$0xff]
    %v58 = vld [vmem:[#allocation3 + $0x10] sm:$0xff]
    %v59 = vld [vmem:[#allocation3 + $0x18] sm:$0xff]
    %v60 = vld [vmem:[#allocation3 + $0x20] sm:$0xff]
    %v61 = vld [vmem:[#allocation3 + $0x28] sm:$0xff]
    %v62 = vld [vmem:[#allocation3 + $0x30] sm:$0xff]
    %v63 = vld [vmem:[#allocation3 + $0x38] sm:$0xff]
    %v64 = vld [vmem:[#allocation3 + $0x40] sm:$0xff]
    %v65 = vld [vmem:[#allocation3 + $0x48] sm:$0xff]
    %v66 = vld [vmem:[#allocation3 + $0x50] sm:$0xff]
    %v67 = vld [vmem:[#allocation3 + $0x58] sm:$0xff]
    %v68 = vld [vmem:[#allocation3 + $0x60] sm:$0xff]
    %v69 = vld [vmem:[#allocation3 + $0x68] sm:$0xff]
    %v70 = vld [vmem:[#allocation3 + $0x70] sm:$0xff]
    %v71 = vld [vmem:[#allocation3 + $0x78] sm:$0xff]
    %v72 = vld [vmem:[#allocation3 + $0x80] sm:$0xff]
    %v73 = vld [vmem:[#allocation3 + $0x88] sm:$0xff]
    %v74 = vld [vmem:[#allocation3 + $0x90] sm:$0xff]
    %v75 = vld [vmem:[#allocation3 + $0x98] sm:$0xff]
    %v76 = vld [vmem:[#allocation3 + $0xa0] sm:$0xff]
    %v77 = vld [vmem:[#allocation3 + $0xa8] sm:$0xff]
    %v78 = vld [vmem:[#allocation3 + $0xb0] sm:$0xff]
    %v79 = vld [vmem:[#allocation3 + $0xb8] sm:$0xff]
    %v80 = vld [vmem:[#allocation3 + $0xc0] sm:$0xff]
    %v81 = vld [vmem:[#allocation3 + $0xc8] sm:$0xff]
    %v82 = vld [vmem:[#allocation3 + $0xd0] sm:$0xff]
    %v83 = vld [vmem:[#allocation3 + $0xd8] sm:$0xff]
    %v84 = vld [vmem:[#allocation3 + $0xe0] sm:$0xff]
    %v85 = vld [vmem:[#allocation3 + $0xe8] sm:$0xff]
    %v86 = vld [vmem:[#allocation3 + $0xf0] sm:$0xff]
    %v87 = vld [vmem:[#allocation3 + $0xf8] sm:$0xff]
    %v88 = vld [vmem:[#allocation3 + $0x100] sm:$0xff]
    %v89 = vld [vmem:[#allocation3 + $0x108] sm:$0xff]
    %v90 = vld [vmem:[#allocation3 + $0x110] sm:$0xff]
    %v91 = vld [vmem:[#allocation3 + $0x118] sm:$0xff]
    %v92 = vld [vmem:[#allocation3 + $0x120] sm:$0xff]
    %v93 = vld [vmem:[#allocation3 + $0x128] sm:$0xff]
    %v94 = vld [vmem:[#allocation3 + $0x130] sm:$0xff]
    %v95 = vld [vmem:[#allocation3 + $0x138] sm:$0xff]
    %v96 = vld [vmem:[#allocation3 + $0x140] sm:$0xff]
    %v97 = vld [vmem:[#allocation3 + $0x148] sm:$0xff]
    %v98 = vld [vmem:[#allocation3 + $0x150] sm:$0xff]
    %v99 = vld [vmem:[#allocation3 + $0x158] sm:$0xff]
    %v100 = vld [vmem:[#allocation3 + $0x160] sm:$0xff]
    %v101 = vld [vmem:[#allocation3 + $0x168] sm:$0xff]
    %v102 = vld [vmem:[#allocation3 + $0x170] sm:$0xff]
    %v103 = vld [vmem:[#allocation3 + $0x178] sm:$0xff]
    %v104 = vld [vmem:[#allocation3 + $0x180] sm:$0xff]
    %v105 = vld [vmem:[#allocation3 + $0x188] sm:$0xff]
    %v106 = vld [vmem:[#allocation3 + $0x190] sm:$0xff]
    %v107 = vld [vmem:[#allocation3 + $0x198] sm:$0xff]
    %v108 = vld [vmem:[#allocation3 + $0x1a0] sm:$0xff]
    %v109 = vld [vmem:[#allocation3 + $0x1a8] sm:$0xff]
    %v110 = vld [vmem:[#allocation3 + $0x1b0] sm:$0xff]
    %v111 = vld [vmem:[#allocation3 + $0x1b8] sm:$0xff]
    %v112 = vld [vmem:[#allocation3 + $0x1c0] sm:$0xff]
    %v113 = vld [vmem:[#allocation3 + $0x1c8] sm:$0xff]
    %v114 = vld [vmem:[#allocation3 + $0x1d0] sm:$0xff]
    %v115 = vld [vmem:[#allocation3 + $0x1d8] sm:$0xff]
    %v116 = vld [vmem:[#allocation3 + $0x1e0] sm:$0xff]
    %v117 = vld [vmem:[#allocation3 + $0x1e8] sm:$0xff]
    %v118 = vld [vmem:[#allocation3 + $0x1f0] sm:$0xff]
    %v119 = vld [vmem:[#allocation3 + $0x1f8] sm:$0xff]
    %v120 = vld [vmem:[#allocation3 + $0x200] sm:$0xff]
    %v121 = vld [vmem:[#allocation3 + $0x208] sm:$0xff]
    %v122 = vld [vmem:[#allocation3 + $0x210] sm:$0xff]
    %v123 = vld [vmem:[#allocation3 + $0x218] sm:$0xff]
    %v124 = vld [vmem:[#allocation3 + $0x220] sm:$0xff]
    %v125 = vld [vmem:[#allocation3 + $0x228] sm:$0xff]
    %v126 = vld [vmem:[#allocation3 + $0x230] sm:$0xff]
    %v127 = vld [vmem:[#allocation3 + $0x238] sm:$0xff]
    %v128 = vld [vmem:[#allocation3 + $0x240] sm:$0xff]
    %v129 = vld [vmem:[#allocation3 + $0x248] sm:$0xff]
    %v130 = vld [vmem:[#allocation3 + $0x250] sm:$0xff]
    %v131 = vld [vmem:[#allocation3 + $0x258] sm:$0xff]
    %v132 = vld [vmem:[#allocation3 + $0x260] sm:$0xff]
    %v133 = vld [vmem:[#allocation3 + $0x268] sm:$0xff]
    %v134 = vld [vmem:[#allocation3 + $0x270] sm:$0xff]
    %v135 = vld [vmem:[#allocation3 + $0x278] sm:$0xff]
    %v136 = vld [vmem:[#allocation3 + $0x280] sm:$0xff]
    %v137 = vld [vmem:[#allocation3 + $0x288] sm:$0xff]
    %v138 = vld [vmem:[#allocation3 + $0x290] sm:$0xff]
    %v139 = vld [vmem:[#allocation3 + $0x298] sm:$0xff]
    %v140 = vld [vmem:[#allocation3 + $0x2a0] sm:$0xff]
    %v141 = vld [vmem:[#allocation3 + $0x2a8] sm:$0xff]
    %v142 = vld [vmem:[#allocation3 + $0x2b0] sm:$0xff]
    %v143 = vld [vmem:[#allocation3 + $0x2b8] sm:$0xff]
    %v144 = vld [vmem:[#allocation3 + $0x2c0] sm:$0xff]
    %v145 = vld [vmem:[#allocation3 + $0x2c8] sm:$0xff]
    %v146 = vld [vmem:[#allocation3 + $0x2d0] sm:$0xff]
    %v147 = vld [vmem:[#allocation3 + $0x2d8] sm:$0xff]
    %v148 = vld [vmem:[#allocation3 + $0x2e0] sm:$0xff]
    %v149 = vld [vmem:[#allocation3 + $0x2e8] sm:$0xff]
    %v150 = vld [vmem:[#allocation3 + $0x2f0] sm:$0xff]
    %v151 = vld [vmem:[#allocation3 + $0x2f8] sm:$0xff]
    %v152 = vld [vmem:[#allocation3 + $0x300] sm:$0xff]
    %v153 = vld [vmem:[#allocation3 + $0x308] sm:$0xff]
    %v154 = vld [vmem:[#allocation3 + $0x310] sm:$0xff]
    %v155 = vld [vmem:[#allocation3 + $0x318] sm:$0xff]
    %v156 = vld [vmem:[#allocation3 + $0x320] sm:$0xff]
    %v157 = vld [vmem:[#allocation3 + $0x328] sm:$0xff]
    %v158 = vld [vmem:[#allocation3 + $0x330] sm:$0xff]
    %v159 = vld [vmem:[#allocation3 + $0x338] sm:$0xff]
    %v160 = vld [vmem:[#allocation3 + $0x340] sm:$0xff]
    %v161 = vld [vmem:[#allocation3 + $0x348] sm:$0xff]
    %v162 = vld [vmem:[#allocation3 + $0x350] sm:$0xff]
    %v163 = vld [vmem:[#allocation3 + $0x358] sm:$0xff]
    %v164 = vld [vmem:[#allocation3 + $0x360] sm:$0xff]
    %v165 = vld [vmem:[#allocation3 + $0x368] sm:$0xff]
    %v166 = vld [vmem:[#allocation3 + $0x370] sm:$0xff]
    %v167 = vld [vmem:[#allocation3 + $0x378] sm:$0xff]
    %v168 = vld [vmem:[#allocation3 + $0x380] sm:$0xff]
    %v169 = vld [vmem:[#allocation3 + $0x388] sm:$0xff]
    %v170 = vld [vmem:[#allocation3 + $0x390] sm:$0xff]
    %v171 = vld [vmem:[#allocation3 + $0x398] sm:$0xff]
    %v172 = vld [vmem:[#allocation3 + $0x3a0] sm:$0xff]
    %v173 = vld [vmem:[#allocation3 + $0x3a8] sm:$0xff]
    %v174 = vld [vmem:[#allocation3 + $0x3b0] sm:$0xff]
    %v175 = vld [vmem:[#allocation3 + $0x3b8] sm:$0xff]
    %v176 = vld [vmem:[#allocation3 + $0x3c0] sm:$0xff]
    %v177 = vld [vmem:[#allocation3 + $0x3c8] sm:$0xff]
    %v178 = vld [vmem:[#allocation3 + $0x3d0] sm:$0xff]
    %v179 = vld [vmem:[#allocation3 + $0x3d8] sm:$0xff]
    %v180 = vld [vmem:[#allocation3 + $0x3e0] sm:$0xff]
    %v181 = vld [vmem:[#allocation3 + $0x3e8] sm:$0xff]
    %v182 = vld [vmem:[#allocation3 + $0x3f0] sm:$0xff]
    %v183 = vld [vmem:[#allocation3 + $0x3f8] sm:$0xff]
    %v184 = vld [vmem:[%s2] sm:$0xf]
    %v186 = vperm.slane %v184, 0
    %v187 = vperm.slane %v184, 1
    %v188 = vperm.slane %v184, 2
    %v189 = vperm.slane %v184, 3
    %194 = vmatpush.msra.mxu0 %v116
    %195 = vmatpush.msra.mxu0 %v112
    %196 = vmatpush.msra.mxu0 %v108
    %197 = vmatpush.msra.mxu0 %v104
    %198 = vmatpush.msra.mxu0 %v100
    %199 = vmatpush.msra.mxu0 %v96
    %200 = vmatpush.msra.mxu0 %v92
    %201 = vmatpush.msra.mxu0 %v88
    %202 = vmatpush.msra.mxu0 %v84
    %203 = vmatpush.msra.mxu0 %v80
    %204 = vmatpush.msra.mxu0 %v76
    %205 = vmatpush.msra.mxu0 %v72
    %206 = vmatpush.msra.mxu0 %v68
    %207 = vmatpush.msra.mxu0 %v64
    %208 = vmatpush.msra.mxu0 %v60
    %209 = vmatpush.msra.mxu0 %v56
    %210 = vmatmul.f32.gmra.mxu0 %v40
    %v211 = vpop.f32.mrf.mxu0
    %v212 = vadd.f32 %v186, %v211
    %213 = vmatmul.f32.gmra.mxu0 %v42
    %v214 = vpop.f32.mrf.mxu0
    %v215 = vadd.f32 %v186, %v214
    %216 = vmatmul.f32.gmra.mxu0 %v44
    %v217 = vpop.f32.mrf.mxu0
    %v218 = vadd.f32 %v186, %v217
    %219 = vmatmul.f32.gmra.mxu0 %v46
    %v220 = vpop.f32.mrf.mxu0
    %v221 = vadd.f32 %v186, %v220
    %222 = vmatmul.f32.gmra.mxu0 %v48
    %v223 = vpop.f32.mrf.mxu0
    %v224 = vadd.f32 %v186, %v223
    %225 = vmatmul.f32.gmra.mxu0 %v50
    %v226 = vpop.f32.mrf.mxu0
    %v227 = vadd.f32 %v186, %v226
    %228 = vmatmul.f32.gmra.mxu0 %v52
    %v229 = vpop.f32.mrf.mxu0
    %v230 = vadd.f32 %v186, %v229
    %231 = vmatmul.f32.gmra.mxu0 %v54
    %v232 = vpop.f32.mrf.mxu0
    %v233 = vadd.f32 %v186, %v232
    %234 = vdwg.mxu0
    %235 = vmatpush.msra.mxu0 %v180
    %236 = vmatpush.msra.mxu0 %v176
    %237 = vmatpush.msra.mxu0 %v172
    %238 = vmatpush.msra.mxu0 %v168
    %239 = vmatpush.msra.mxu0 %v164
    %240 = vmatpush.msra.mxu0 %v160
    %241 = vmatpush.msra.mxu0 %v156
    %242 = vmatpush.msra.mxu0 %v152
    %243 = vmatpush.msra.mxu0 %v148
    %244 = vmatpush.msra.mxu0 %v144
    %245 = vmatpush.msra.mxu0 %v140
    %246 = vmatpush.msra.mxu0 %v136
    %247 = vmatpush.msra.mxu0 %v132
    %248 = vmatpush.msra.mxu0 %v128
    %249 = vmatpush.msra.mxu0 %v124
    %250 = vmatpush.msra.mxu0 %v120
    %251 = vmatmul.f32.gmra.mxu0 %v41
    %v252 = vpop.f32.mrf.mxu0
    %v253 = vadd.f32 %v212, %v252
    %254 = vmatmul.f32.gmra.mxu0 %v43
    %v255 = vpop.f32.mrf.mxu0
    %v256 = vadd.f32 %v215, %v255
    %257 = vmatmul.f32.gmra.mxu0 %v45
    %v258 = vpop.f32.mrf.mxu0
    %v259 = vadd.f32 %v218, %v258
    %260 = vmatmul.f32.gmra.mxu0 %v47
    %v261 = vpop.f32.mrf.mxu0
    %v262 = vadd.f32 %v221, %v261
    %263 = vmatmul.f32.gmra.mxu0 %v49
    %v264 = vpop.f32.mrf.mxu0
    %v265 = vadd.f32 %v224, %v264
    %266 = vmatmul.f32.gmra.mxu0 %v51
    %v267 = vpop.f32.mrf.mxu0
    %v268 = vadd.f32 %v227, %v267
    %269 = vmatmul.f32.gmra.mxu0 %v53
    %v270 = vpop.f32.mrf.mxu0
    %v271 = vadd.f32 %v230, %v270
    %272 = vmatmul.f32.gmra.mxu0 %v55
    %v273 = vpop.f32.mrf.mxu0
    %v274 = vadd.f32 %v233, %v273
    %275 = vdwg.mxu0
    %276 = vmatpush.msra.mxu0 %v117
    %277 = vmatpush.msra.mxu0 %v113
    %278 = vmatpush.msra.mxu0 %v109
    %279 = vmatpush.msra.mxu0 %v105
    %280 = vmatpush.msra.mxu0 %v101
    %281 = vmatpush.msra.mxu0 %v97
    %282 = vmatpush.msra.mxu0 %v93
    %283 = vmatpush.msra.mxu0 %v89
    %284 = vmatpush.msra.mxu0 %v85
    %285 = vmatpush.msra.mxu0 %v81
    %286 = vmatpush.msra.mxu0 %v77
    %287 = vmatpush.msra.mxu0 %v73
    %288 = vmatpush.msra.mxu0 %v69
    %289 = vmatpush.msra.mxu0 %v65
    %290 = vmatpush.msra.mxu0 %v61
    %291 = vmatpush.msra.mxu0 %v57
    %292 = vmatmul.f32.gmra.mxu0 %v40
    %v293 = vpop.f32.mrf.mxu0
    %v294 = vadd.f32 %v187, %v293
    %295 = vmatmul.f32.gmra.mxu0 %v42
    %v296 = vpop.f32.mrf.mxu0
    %v297 = vadd.f32 %v187, %v296
    %298 = vmatmul.f32.gmra.mxu0 %v44
    %v299 = vpop.f32.mrf.mxu0
    %v300 = vadd.f32 %v187, %v299
    %301 = vmatmul.f32.gmra.mxu0 %v46
    %v302 = vpop.f32.mrf.mxu0
    %v303 = vadd.f32 %v187, %v302
    %304 = vmatmul.f32.gmra.mxu0 %v48
    %v305 = vpop.f32.mrf.mxu0
    %v306 = vadd.f32 %v187, %v305
    %307 = vmatmul.f32.gmra.mxu0 %v50
    %v308 = vpop.f32.mrf.mxu0
    %v309 = vadd.f32 %v187, %v308
    %310 = vmatmul.f32.gmra.mxu0 %v52
    %v311 = vpop.f32.mrf.mxu0
    %v312 = vadd.f32 %v187, %v311
    %313 = vmatmul.f32.gmra.mxu0 %v54
    %v314 = vpop.f32.mrf.mxu0
    %v315 = vadd.f32 %v187, %v314
    %316 = vdwg.mxu0
    %317 = vmatpush.msra.mxu0 %v181
    %318 = vmatpush.msra.mxu0 %v177
    %319 = vmatpush.msra.mxu0 %v173
    %320 = vmatpush.msra.mxu0 %v169
    %321 = vmatpush.msra.mxu0 %v165
    %322 = vmatpush.msra.mxu0 %v161
    %323 = vmatpush.msra.mxu0 %v157
    %324 = vmatpush.msra.mxu0 %v153
    %325 = vmatpush.msra.mxu0 %v149
    %326 = vmatpush.msra.mxu0 %v145
    %327 = vmatpush.msra.mxu0 %v141
    %328 = vmatpush.msra.mxu0 %v137
    %329 = vmatpush.msra.mxu0 %v133
    %330 = vmatpush.msra.mxu0 %v129
    %331 = vmatpush.msra.mxu0 %v125
    %332 = vmatpush.msra.mxu0 %v121
    %333 = vmatmul.f32.gmra.mxu0 %v41
    %v334 = vpop.f32.mrf.mxu0
    %v335 = vadd.f32 %v294, %v334
    %336 = vmatmul.f32.gmra.mxu0 %v43
    %v337 = vpop.f32.mrf.mxu0
    %v338 = vadd.f32 %v297, %v337
    %339 = vmatmul.f32.gmra.mxu0 %v45
    %v340 = vpop.f32.mrf.mxu0
    %v341 = vadd.f32 %v300, %v340
    %342 = vmatmul.f32.gmra.mxu0 %v47
    %v343 = vpop.f32.mrf.mxu0
    %v344 = vadd.f32 %v303, %v343
    %345 = vmatmul.f32.gmra.mxu0 %v49
    %v346 = vpop.f32.mrf.mxu0
    %v347 = vadd.f32 %v306, %v346
    %348 = vmatmul.f32.gmra.mxu0 %v51
    %v349 = vpop.f32.mrf.mxu0
    %v350 = vadd.f32 %v309, %v349
    %351 = vmatmul.f32.gmra.mxu0 %v53
    %v352 = vpop.f32.mrf.mxu0
    %v353 = vadd.f32 %v312, %v352
    %354 = vmatmul.f32.gmra.mxu0 %v55
    %v355 = vpop.f32.mrf.mxu0
    %v356 = vadd.f32 %v315, %v355
    %357 = vdwg.mxu0
    %358 = vmatpush.msra.mxu0 %v118
    %359 = vmatpush.msra.mxu0 %v114
    %360 = vmatpush.msra.mxu0 %v110
    %361 = vmatpush.msra.mxu0 %v106
    %362 = vmatpush.msra.mxu0 %v102
    %363 = vmatpush.msra.mxu0 %v98
    %364 = vmatpush.msra.mxu0 %v94
    %365 = vmatpush.msra.mxu0 %v90
    %366 = vmatpush.msra.mxu0 %v86
    %367 = vmatpush.msra.mxu0 %v82
    %368 = vmatpush.msra.mxu0 %v78
    %369 = vmatpush.msra.mxu0 %v74
    %370 = vmatpush.msra.mxu0 %v70
    %371 = vmatpush.msra.mxu0 %v66
    %372 = vmatpush.msra.mxu0 %v62
    %373 = vmatpush.msra.mxu0 %v58
    %374 = vmatmul.f32.gmra.mxu0 %v40
    %v375 = vpop.f32.mrf.mxu0
    %v376 = vadd.f32 %v188, %v375
    %377 = vmatmul.f32.gmra.mxu0 %v42
    %v378 = vpop.f32.mrf.mxu0
    %v379 = vadd.f32 %v188, %v378
    %380 = vmatmul.f32.gmra.mxu0 %v44
    %v381 = vpop.f32.mrf.mxu0
    %v382 = vadd.f32 %v188, %v381
    %383 = vmatmul.f32.gmra.mxu0 %v46
    %v384 = vpop.f32.mrf.mxu0
    %v385 = vadd.f32 %v188, %v384
    %386 = vmatmul.f32.gmra.mxu0 %v48
    %v387 = vpop.f32.mrf.mxu0
    %v388 = vadd.f32 %v188, %v387
    %389 = vmatmul.f32.gmra.mxu0 %v50
    %v390 = vpop.f32.mrf.mxu0
    %v391 = vadd.f32 %v188, %v390
    %392 = vmatmul.f32.gmra.mxu0 %v52
    %v393 = vpop.f32.mrf.mxu0
    %v394 = vadd.f32 %v188, %v393
    %395 = vmatmul.f32.gmra.mxu0 %v54
    %v396 = vpop.f32.mrf.mxu0
    %v397 = vadd.f32 %v188, %v396
    %398 = vdwg.mxu0
    %399 = vmatpush.msra.mxu0 %v182
    %400 = vmatpush.msra.mxu0 %v178
    %401 = vmatpush.msra.mxu0 %v174
    %402 = vmatpush.msra.mxu0 %v170
    %403 = vmatpush.msra.mxu0 %v166
    %404 = vmatpush.msra.mxu0 %v162
    %405 = vmatpush.msra.mxu0 %v158
    %406 = vmatpush.msra.mxu0 %v154
    %407 = vmatpush.msra.mxu0 %v150
    %408 = vmatpush.msra.mxu0 %v146
    %409 = vmatpush.msra.mxu0 %v142
    %410 = vmatpush.msra.mxu0 %v138
    %411 = vmatpush.msra.mxu0 %v134
    %412 = vmatpush.msra.mxu0 %v130
    %413 = vmatpush.msra.mxu0 %v126
    %414 = vmatpush.msra.mxu0 %v122
    %415 = vmatmul.f32.gmra.mxu0 %v41
    %v416 = vpop.f32.mrf.mxu0
    %v417 = vadd.f32 %v376, %v416
    %418 = vmatmul.f32.gmra.mxu0 %v43
    %v419 = vpop.f32.mrf.mxu0
    %v420 = vadd.f32 %v379, %v419
    %421 = vmatmul.f32.gmra.mxu0 %v45
    %v422 = vpop.f32.mrf.mxu0
    %v423 = vadd.f32 %v382, %v422
    %424 = vmatmul.f32.gmra.mxu0 %v47
    %v425 = vpop.f32.mrf.mxu0
    %v426 = vadd.f32 %v385, %v425
    %427 = vmatmul.f32.gmra.mxu0 %v49
    %v428 = vpop.f32.mrf.mxu0
    %v429 = vadd.f32 %v388, %v428
    %430 = vmatmul.f32.gmra.mxu0 %v51
    %v431 = vpop.f32.mrf.mxu0
    %v432 = vadd.f32 %v391, %v431
    %433 = vmatmul.f32.gmra.mxu0 %v53
    %v434 = vpop.f32.mrf.mxu0
    %v435 = vadd.f32 %v394, %v434
    %436 = vmatmul.f32.gmra.mxu0 %v55
    %v437 = vpop.f32.mrf.mxu0
    %v438 = vadd.f32 %v397, %v437
    %439 = vdwg.mxu0
    %440 = vmatpush.msra.mxu0 %v119
    %441 = vmatpush.msra.mxu0 %v115
    %442 = vmatpush.msra.mxu0 %v111
    %443 = vmatpush.msra.mxu0 %v107
    %444 = vmatpush.msra.mxu0 %v103
    %445 = vmatpush.msra.mxu0 %v99
    %446 = vmatpush.msra.mxu0 %v95
    %447 = vmatpush.msra.mxu0 %v91
    %448 = vmatpush.msra.mxu0 %v87
    %449 = vmatpush.msra.mxu0 %v83
    %450 = vmatpush.msra.mxu0 %v79
    %451 = vmatpush.msra.mxu0 %v75
    %452 = vmatpush.msra.mxu0 %v71
    %453 = vmatpush.msra.mxu0 %v67
    %454 = vmatpush.msra.mxu0 %v63
    %455 = vmatpush.msra.mxu0 %v59
    %456 = vmatmul.f32.gmra.mxu0 %v40
    %v457 = vpop.f32.mrf.mxu0
    %v458 = vadd.f32 %v189, %v457
    %459 = vmatmul.f32.gmra.mxu0 %v42
    %v460 = vpop.f32.mrf.mxu0
    %v461 = vadd.f32 %v189, %v460
    %462 = vmatmul.f32.gmra.mxu0 %v44
    %v463 = vpop.f32.mrf.mxu0
    %v464 = vadd.f32 %v189, %v463
    %465 = vmatmul.f32.gmra.mxu0 %v46
    %v466 = vpop.f32.mrf.mxu0
    %v467 = vadd.f32 %v189, %v466
    %468 = vmatmul.f32.gmra.mxu0 %v48
    %v469 = vpop.f32.mrf.mxu0
    %v470 = vadd.f32 %v189, %v469
    %471 = vmatmul.f32.gmra.mxu0 %v50
    %v472 = vpop.f32.mrf.mxu0
    %v473 = vadd.f32 %v189, %v472
    %474 = vmatmul.f32.gmra.mxu0 %v52
    %v475 = vpop.f32.mrf.mxu0
    %v476 = vadd.f32 %v189, %v475
    %477 = vmatmul.f32.gmra.mxu0 %v54
    %v478 = vpop.f32.mrf.mxu0
    %v479 = vadd.f32 %v189, %v478
    %480 = vdwg.mxu0
    %481 = vmatpush.msra.mxu0 %v183
    %482 = vmatpush.msra.mxu0 %v179
    %483 = vmatpush.msra.mxu0 %v175
    %484 = vmatpush.msra.mxu0 %v171
    %485 = vmatpush.msra.mxu0 %v167
    %486 = vmatpush.msra.mxu0 %v163
    %487 = vmatpush.msra.mxu0 %v159
    %488 = vmatpush.msra.mxu0 %v155
    %489 = vmatpush.msra.mxu0 %v151
    %490 = vmatpush.msra.mxu0 %v147
    %491 = vmatpush.msra.mxu0 %v143
    %492 = vmatpush.msra.mxu0 %v139
    %493 = vmatpush.msra.mxu0 %v135
    %494 = vmatpush.msra.mxu0 %v131
    %495 = vmatpush.msra.mxu0 %v127
    %496 = vmatpush.msra.mxu0 %v123
    %497 = vmatmul.f32.gmra.mxu0 %v41
    %v498 = vpop.f32.mrf.mxu0
    %v499 = vadd.f32 %v458, %v498
    %500 = vmatmul.f32.gmra.mxu0 %v43
    %v501 = vpop.f32.mrf.mxu0
    %v502 = vadd.f32 %v461, %v501
    %503 = vmatmul.f32.gmra.mxu0 %v45
    %v504 = vpop.f32.mrf.mxu0
    %v505 = vadd.f32 %v464, %v504
    %506 = vmatmul.f32.gmra.mxu0 %v47
    %v507 = vpop.f32.mrf.mxu0
    %v508 = vadd.f32 %v467, %v507
    %509 = vmatmul.f32.gmra.mxu0 %v49
    %v510 = vpop.f32.mrf.mxu0
    %v511 = vadd.f32 %v470, %v510
    %512 = vmatmul.f32.gmra.mxu0 %v51
    %v513 = vpop.f32.mrf.mxu0
    %v514 = vadd.f32 %v473, %v513
    %515 = vmatmul.f32.gmra.mxu0 %v53
    %v516 = vpop.f32.mrf.mxu0
    %v517 = vadd.f32 %v476, %v516
    %518 = vmatmul.f32.gmra.mxu0 %v55
    %v519 = vpop.f32.mrf.mxu0
    %v520 = vadd.f32 %v479, %v519
    %521 = vdwg.mxu0
    %v522 = vadd.f32 %v253, 0.0
    %v523 = vadd.f32 %v335, 0.0
    %v524 = vadd.f32 %v417, 0.0
    %v525 = vadd.f32 %v499, 0.0
    %vm526 = vcmp.gt.f32.partialorder %v522, 1.0
    %vm527 = vcmp.gt.f32.partialorder %v523, 1.0
    %vm528 = vcmp.gt.f32.partialorder %v524, 1.0
    %vm529 = vcmp.gt.f32.partialorder %v525, 1.0
    %v530 = vsel %vm526, 1, 0
    %v531 = vsel %vm527, 1, 0
    %v532 = vsel %vm528, 1, 0
    %v533 = vsel %vm529, 1, 0
    %v534 = vcvt.s32.f32 %v530
    %v535 = vcvt.s32.f32 %v531
    %v536 = vcvt.s32.f32 %v532
    %v537 = vcvt.s32.f32 %v533
    %538 = vst [vmem:[#allocation2] sm:$0xff] %v534
    %539 = vst [vmem:[#allocation2 + $0x8] sm:$0xff] %v535
    %540 = vst [vmem:[#allocation2 + $0x10] sm:$0xff] %v536
    %541 = vst [vmem:[#allocation2 + $0x18] sm:$0xff] %v537
    %v542 = vmul.f32 %v522, 0.8
    %v543 = vmul.f32 %v523, 0.8
    %v544 = vmul.f32 %v524, 0.8
    %v545 = vmul.f32 %v525, 0.8
    %v546 = vadd.f32 %v542, %v256
    %v547 = vadd.f32 %v543, %v338
    %v548 = vadd.f32 %v544, %v420
    %v549 = vadd.f32 %v545, %v502
    %v550 = vsub.f32 %v546, %v534
    %v551 = vsub.f32 %v547, %v535
    %v552 = vsub.f32 %v548, %v536
    %v553 = vsub.f32 %v549, %v537
    %vm554 = vcmp.gt.f32.partialorder %v550, 1.0
    %vm555 = vcmp.gt.f32.partialorder %v551, 1.0
    %vm556 = vcmp.gt.f32.partialorder %v552, 1.0
    %vm557 = vcmp.gt.f32.partialorder %v553, 1.0
    %v558 = vsel %vm554, 1, 0
    %v559 = vsel %vm555, 1, 0
    %v560 = vsel %vm556, 1, 0
    %v561 = vsel %vm557, 1, 0
    %v562 = vcvt.s32.f32 %v558
    %v563 = vcvt.s32.f32 %v559
    %v564 = vcvt.s32.f32 %v560
    %v565 = vcvt.s32.f32 %v561
    %566 = vst [vmem:[#allocation2 + $0x20] sm:$0xff] %v562
    %567 = vst [vmem:[#allocation2 + $0x28] sm:$0xff] %v563
    %568 = vst [vmem:[#allocation2 + $0x30] sm:$0xff] %v564
    %569 = vst [vmem:[#allocation2 + $0x38] sm:$0xff] %v565
    %v570 = vmul.f32 %v550, 0.8
    %v571 = vmul.f32 %v551, 0.8
    %v572 = vmul.f32 %v552, 0.8
    %v573 = vmul.f32 %v553, 0.8
    %v574 = vadd.f32 %v570, %v259
    %v575 = vadd.f32 %v571, %v341
    %v576 = vadd.f32 %v572, %v423
    %v577 = vadd.f32 %v573, %v505
    %v578 = vsub.f32 %v574, %v562
    %v579 = vsub.f32 %v575, %v563
    %v580 = vsub.f32 %v576, %v564
    %v581 = vsub.f32 %v577, %v565
    %vm582 = vcmp.gt.f32.partialorder %v578, 1.0
    %vm583 = vcmp.gt.f32.partialorder %v579, 1.0
    %vm584 = vcmp.gt.f32.partialorder %v580, 1.0
    %vm585 = vcmp.gt.f32.partialorder %v581, 1.0
    %v586 = vsel %vm582, 1, 0
    %v587 = vsel %vm583, 1, 0
    %v588 = vsel %vm584, 1, 0
    %v589 = vsel %vm585, 1, 0
    %v590 = vcvt.s32.f32 %v586
    %v591 = vcvt.s32.f32 %v587
    %v592 = vcvt.s32.f32 %v588
    %v593 = vcvt.s32.f32 %v589
    %594 = vst [vmem:[#allocation2 + $0x40] sm:$0xff] %v590
    %595 = vst [vmem:[#allocation2 + $0x48] sm:$0xff] %v591
    %596 = vst [vmem:[#allocation2 + $0x50] sm:$0xff] %v592
    %597 = vst [vmem:[#allocation2 + $0x58] sm:$0xff] %v593
    %v598 = vmul.f32 %v578, 0.8
    %v599 = vmul.f32 %v579, 0.8
    %v600 = vmul.f32 %v580, 0.8
    %v601 = vmul.f32 %v581, 0.8
    %v602 = vadd.f32 %v598, %v262
    %v603 = vadd.f32 %v599, %v344
    %v604 = vadd.f32 %v600, %v426
    %v605 = vadd.f32 %v601, %v508
    %v606 = vsub.f32 %v602, %v590
    %v607 = vsub.f32 %v603, %v591
    %v608 = vsub.f32 %v604, %v592
    %v609 = vsub.f32 %v605, %v593
    %vm610 = vcmp.gt.f32.partialorder %v606, 1.0
    %vm611 = vcmp.gt.f32.partialorder %v607, 1.0
    %vm612 = vcmp.gt.f32.partialorder %v608, 1.0
    %vm613 = vcmp.gt.f32.partialorder %v609, 1.0
    %v614 = vsel %vm610, 1, 0
    %v615 = vsel %vm611, 1, 0
    %v616 = vsel %vm612, 1, 0
    %v617 = vsel %vm613, 1, 0
    %v618 = vcvt.s32.f32 %v614
    %v619 = vcvt.s32.f32 %v615
    %v620 = vcvt.s32.f32 %v616
    %v621 = vcvt.s32.f32 %v617
    %622 = vst [vmem:[#allocation2 + $0x60] sm:$0xff] %v618
    %623 = vst [vmem:[#allocation2 + $0x68] sm:$0xff] %v619
    %624 = vst [vmem:[#allocation2 + $0x70] sm:$0xff] %v620
    %625 = vst [vmem:[#allocation2 + $0x78] sm:$0xff] %v621
    %v626 = vmul.f32 %v606, 0.8
    %v627 = vmul.f32 %v607, 0.8
    %v628 = vmul.f32 %v608, 0.8
    %v629 = vmul.f32 %v609, 0.8
    %v630 = vadd.f32 %v626, %v265
    %v631 = vadd.f32 %v627, %v347
    %v632 = vadd.f32 %v628, %v429
    %v633 = vadd.f32 %v629, %v511
    %v634 = vsub.f32 %v630, %v618
    %v635 = vsub.f32 %v631, %v619
    %v636 = vsub.f32 %v632, %v620
    %v637 = vsub.f32 %v633, %v621
    %vm638 = vcmp.gt.f32.partialorder %v634, 1.0
    %vm639 = vcmp.gt.f32.partialorder %v635, 1.0
    %vm640 = vcmp.gt.f32.partialorder %v636, 1.0
    %vm641 = vcmp.gt.f32.partialorder %v637, 1.0
    %v642 = vsel %vm638, 1, 0
    %v643 = vsel %vm639, 1, 0
    %v644 = vsel %vm640, 1, 0
    %v645 = vsel %vm641, 1, 0
    %v646 = vcvt.s32.f32 %v642
    %v647 = vcvt.s32.f32 %v643
    %v648 = vcvt.s32.f32 %v644
    %v649 = vcvt.s32.f32 %v645
    %650 = vst [vmem:[#allocation2 + $0x80] sm:$0xff] %v646
    %651 = vst [vmem:[#allocation2 + $0x88] sm:$0xff] %v647
    %652 = vst [vmem:[#allocation2 + $0x90] sm:$0xff] %v648
    %653 = vst [vmem:[#allocation2 + $0x98] sm:$0xff] %v649
    %v654 = vmul.f32 %v634, 0.8
    %v655 = vmul.f32 %v635, 0.8
    %v656 = vmul.f32 %v636, 0.8
    %v657 = vmul.f32 %v637, 0.8
    %v658 = vadd.f32 %v654, %v268
    %v659 = vadd.f32 %v655, %v350
    %v660 = vadd.f32 %v656, %v432
    %v661 = vadd.f32 %v657, %v514
    %v662 = vsub.f32 %v658, %v646
    %v663 = vsub.f32 %v659, %v647
    %v664 = vsub.f32 %v660, %v648
    %v665 = vsub.f32 %v661, %v649
    %vm666 = vcmp.gt.f32.partialorder %v662, 1.0
    %vm667 = vcmp.gt.f32.partialorder %v663, 1.0
    %vm668 = vcmp.gt.f32.partialorder %v664, 1.0
    %vm669 = vcmp.gt.f32.partialorder %v665, 1.0
    %v670 = vsel %vm666, 1, 0
    %v671 = vsel %vm667, 1, 0
    %v672 = vsel %vm668, 1, 0
    %v673 = vsel %vm669, 1, 0
    %v674 = vcvt.s32.f32 %v670
    %v675 = vcvt.s32.f32 %v671
    %v676 = vcvt.s32.f32 %v672
    %v677 = vcvt.s32.f32 %v673
    %678 = vst [vmem:[#allocation2 + $0xa0] sm:$0xff] %v674
    %679 = vst [vmem:[#allocation2 + $0xa8] sm:$0xff] %v675
    %680 = vst [vmem:[#allocation2 + $0xb0] sm:$0xff] %v676
    %681 = vst [vmem:[#allocation2 + $0xb8] sm:$0xff] %v677
    %v682 = vmul.f32 %v662, 0.8
    %v683 = vmul.f32 %v663, 0.8
    %v684 = vmul.f32 %v664, 0.8
    %v685 = vmul.f32 %v665, 0.8
    %v686 = vadd.f32 %v682, %v271
    %v687 = vadd.f32 %v683, %v353
    %v688 = vadd.f32 %v684, %v435
    %v689 = vadd.f32 %v685, %v517
    %v690 = vsub.f32 %v686, %v674
    %v691 = vsub.f32 %v687, %v675
    %v692 = vsub.f32 %v688, %v676
    %v693 = vsub.f32 %v689, %v677
    %vm694 = vcmp.gt.f32.partialorder %v690, 1.0
    %vm695 = vcmp.gt.f32.partialorder %v691, 1.0
    %vm696 = vcmp.gt.f32.partialorder %v692, 1.0
    %vm697 = vcmp.gt.f32.partialorder %v693, 1.0
    %v698 = vsel %vm694, 1, 0
    %v699 = vsel %vm695, 1, 0
    %v700 = vsel %vm696, 1, 0
    %v701 = vsel %vm697, 1, 0
    %v702 = vcvt.s32.f32 %v698
    %v703 = vcvt.s32.f32 %v699
    %v704 = vcvt.s32.f32 %v700
    %v705 = vcvt.s32.f32 %v701
    %706 = vst [vmem:[#allocation2 + $0xc0] sm:$0xff] %v702
    %707 = vst [vmem:[#allocation2 + $0xc8] sm:$0xff] %v703
    %708 = vst [vmem:[#allocation2 + $0xd0] sm:$0xff] %v704
    %709 = vst [vmem:[#allocation2 + $0xd8] sm:$0xff] %v705
    %v710 = vmul.f32 %v690, 0.8
    %v711 = vmul.f32 %v691, 0.8
    %v712 = vmul.f32 %v692, 0.8
    %v713 = vmul.f32 %v693, 0.8
    %v714 = vadd.f32 %v710, %v274
    %v715 = vadd.f32 %v711, %v356
    %v716 = vadd.f32 %v712, %v438
    %v717 = vadd.f32 %v713, %v520
    %v718 = vsub.f32 %v714, %v702
    %v719 = vsub.f32 %v715, %v703
    %v720 = vsub.f32 %v716, %v704
    %v721 = vsub.f32 %v717, %v705
    %vm722 = vcmp.gt.f32.partialorder %v718, 1.0
    %vm723 = vcmp.gt.f32.partialorder %v719, 1.0
    %vm724 = vcmp.gt.f32.partialorder %v720, 1.0
    %vm725 = vcmp.gt.f32.partialorder %v721, 1.0
    %v726 = vsel %vm722, 1, 0
    %v727 = vsel %vm723, 1, 0
    %v728 = vsel %vm724, 1, 0
    %v729 = vsel %vm725, 1, 0
    %v730 = vcvt.s32.f32 %v726
    %v731 = vcvt.s32.f32 %v727
    %v732 = vcvt.s32.f32 %v728
    %v733 = vcvt.s32.f32 %v729
    %734 = vst [vmem:[#allocation2 + $0xe0] sm:$0xff] %v730
    %735 = vst [vmem:[#allocation2 + $0xe8] sm:$0xff] %v731
    %736 = vst [vmem:[#allocation2 + $0xf0] sm:$0xff] %v732
    %737 = vst [vmem:[#allocation2 + $0xf8] sm:$0xff] %v733
    %v738 = vld [vmem:[#allocation2] sm:$0xff]
    %v739 = vld [vmem:[#allocation2 + $0x8] sm:$0xff]
    %v740 = vld [vmem:[#allocation2 + $0x10] sm:$0xff]
    %v741 = vld [vmem:[#allocation2 + $0x18] sm:$0xff]
    %v742 = vld [vmem:[#allocation2 + $0x20] sm:$0xff]
    %v743 = vld [vmem:[#allocation2 + $0x28] sm:$0xff]
    %v744 = vld [vmem:[#allocation2 + $0x30] sm:$0xff]
    %v745 = vld [vmem:[#allocation2 + $0x38] sm:$0xff]
    %v746 = vld [vmem:[#allocation2 + $0x40] sm:$0xff]
    %v747 = vld [vmem:[#allocation2 + $0x48] sm:$0xff]
    %v748 = vld [vmem:[#allocation2 + $0x50] sm:$0xff]
    %v749 = vld [vmem:[#allocation2 + $0x58] sm:$0xff]
    %v750 = vld [vmem:[#allocation2 + $0x60] sm:$0xff]
    %v751 = vld [vmem:[#allocation2 + $0x68] sm:$0xff]
    %v752 = vld [vmem:[#allocation2 + $0x70] sm:$0xff]
    %v753 = vld [vmem:[#allocation2 + $0x78] sm:$0xff]
    %v754 = vld [vmem:[#allocation2 + $0x80] sm:$0xff]
    %v755 = vld [vmem:[#allocation2 + $0x88] sm:$0xff]
    %v756 = vld [vmem:[#allocation2 + $0x90] sm:$0xff]
    %v757 = vld [vmem:[#allocation2 + $0x98] sm:$0xff]
    %v758 = vld [vmem:[#allocation2 + $0xa0] sm:$0xff]
    %v759 = vld [vmem:[#allocation2 + $0xa8] sm:$0xff]
    %v760 = vld [vmem:[#allocation2 + $0xb0] sm:$0xff]
    %v761 = vld [vmem:[#allocation2 + $0xb8] sm:$0xff]
    %v762 = vld [vmem:[#allocation2 + $0xc0] sm:$0xff]
    %v763 = vld [vmem:[#allocation2 + $0xc8] sm:$0xff]
    %v764 = vld [vmem:[#allocation2 + $0xd0] sm:$0xff]
    %v765 = vld [vmem:[#allocation2 + $0xd8] sm:$0xff]
    %v766 = vld [vmem:[#allocation2 + $0xe0] sm:$0xff]
    %v767 = vld [vmem:[#allocation2 + $0xe8] sm:$0xff]
    %v768 = vld [vmem:[#allocation2 + $0xf0] sm:$0xff]
    %v769 = vld [vmem:[#allocation2 + $0xf8] sm:$0xff]
    %v770 = vld [vmem:[%s3] sm:$0xff]
    %v771 = vld [vmem:[%s3 + $0x8] sm:$0xff]
    %v772 = vld [vmem:[%s3 + $0x10] sm:$0xff]
    %v773 = vld [vmem:[%s3 + $0x18] sm:$0xff]
    %v774 = vld [vmem:[%s3 + $0x20] sm:$0xff]
    %v775 = vld [vmem:[%s3 + $0x28] sm:$0xff]
    %v776 = vld [vmem:[%s3 + $0x30] sm:$0xff]
    %v777 = vld [vmem:[%s3 + $0x38] sm:$0xff]
    %v778 = vld [vmem:[%s3 + $0x40] sm:$0xff]
    %v779 = vld [vmem:[%s3 + $0x48] sm:$0xff]
    %v780 = vld [vmem:[%s3 + $0x50] sm:$0xff]
    %v781 = vld [vmem:[%s3 + $0x58] sm:$0xff]
    %v782 = vld [vmem:[%s3 + $0x60] sm:$0xff]
    %v783 = vld [vmem:[%s3 + $0x68] sm:$0xff]
    %v784 = vld [vmem:[%s3 + $0x70] sm:$0xff]
    %v785 = vld [vmem:[%s3 + $0x78] sm:$0xff]
    %v786 = vld [vmem:[%s3 + $0x80] sm:$0xff]
    %v787 = vld [vmem:[%s3 + $0x88] sm:$0xff]
    %v788 = vld [vmem:[%s3 + $0x90] sm:$0xff]
    %v789 = vld [vmem:[%s3 + $0x98] sm:$0xff]
    %v790 = vld [vmem:[%s3 + $0xa0] sm:$0xff]
    %v791 = vld [vmem:[%s3 + $0xa8] sm:$0xff]
    %v792 = vld [vmem:[%s3 + $0xb0] sm:$0xff]
    %v793 = vld [vmem:[%s3 + $0xb8] sm:$0xff]
    %v794 = vld [vmem:[%s3 + $0xc0] sm:$0xff]
    %v795 = vld [vmem:[%s3 + $0xc8] sm:$0xff]
    %v796 = vld [vmem:[%s3 + $0xd0] sm:$0xff]
    %v797 = vld [vmem:[%s3 + $0xd8] sm:$0xff]
    %v798 = vld [vmem:[%s3 + $0xe0] sm:$0xff]
    %v799 = vld [vmem:[%s3 + $0xe8] sm:$0xff]
    %v800 = vld [vmem:[%s3 + $0xf0] sm:$0xff]
    %v801 = vld [vmem:[%s3 + $0xf8] sm:$0xff]
    %v802 = vld [vmem:[%s3 + $0x100] sm:$0xff]
    %v803 = vld [vmem:[%s3 + $0x108] sm:$0xff]
    %v804 = vld [vmem:[%s3 + $0x110] sm:$0xff]
    %v805 = vld [vmem:[%s3 + $0x118] sm:$0xff]
    %v806 = vld [vmem:[%s3 + $0x120] sm:$0xff]
    %v807 = vld [vmem:[%s3 + $0x128] sm:$0xff]
    %v808 = vld [vmem:[%s3 + $0x130] sm:$0xff]
    %v809 = vld [vmem:[%s3 + $0x138] sm:$0xff]
    %v810 = vld [vmem:[%s3 + $0x140] sm:$0xff]
    %v811 = vld [vmem:[%s3 + $0x148] sm:$0xff]
    %v812 = vld [vmem:[%s3 + $0x150] sm:$0xff]
    %v813 = vld [vmem:[%s3 + $0x158] sm:$0xff]
    %v814 = vld [vmem:[%s3 + $0x160] sm:$0xff]
    %v815 = vld [vmem:[%s3 + $0x168] sm:$0xff]
    %v816 = vld [vmem:[%s3 + $0x170] sm:$0xff]
    %v817 = vld [vmem:[%s3 + $0x178] sm:$0xff]
    %v818 = vld [vmem:[%s3 + $0x180] sm:$0xff]
    %v819 = vld [vmem:[%s3 + $0x188] sm:$0xff]
    %v820 = vld [vmem:[%s3 + $0x190] sm:$0xff]
    %v821 = vld [vmem:[%s3 + $0x198] sm:$0xff]
    %v822 = vld [vmem:[%s3 + $0x1a0] sm:$0xff]
    %v823 = vld [vmem:[%s3 + $0x1a8] sm:$0xff]
    %v824 = vld [vmem:[%s3 + $0x1b0] sm:$0xff]
    %v825 = vld [vmem:[%s3 + $0x1b8] sm:$0xff]
    %v826 = vld [vmem:[%s3 + $0x1c0] sm:$0xff]
    %v827 = vld [vmem:[%s3 + $0x1c8] sm:$0xff]
    %v828 = vld [vmem:[%s3 + $0x1d0] sm:$0xff]
    %v829 = vld [vmem:[%s3 + $0x1d8] sm:$0xff]
    %v830 = vld [vmem:[%s3 + $0x1e0] sm:$0xff]
    %v831 = vld [vmem:[%s3 + $0x1e8] sm:$0xff]
    %v832 = vld [vmem:[%s3 + $0x1f0] sm:$0xff]
    %v833 = vld [vmem:[%s3 + $0x1f8] sm:$0xff]
    %v834 = vld [vmem:[%s4] sm:$0x1]
    %v836 = vperm.slane %v834, 0
    %838 = vmatpush.msra.mxu0 %v785
    %839 = vmatpush.msra.mxu0 %v784
    %840 = vmatpush.msra.mxu0 %v783
    %841 = vmatpush.msra.mxu0 %v782
    %842 = vmatpush.msra.mxu0 %v781
    %843 = vmatpush.msra.mxu0 %v780
    %844 = vmatpush.msra.mxu0 %v779
    %845 = vmatpush.msra.mxu0 %v778
    %846 = vmatpush.msra.mxu0 %v777
    %847 = vmatpush.msra.mxu0 %v776
    %848 = vmatpush.msra.mxu0 %v775
    %849 = vmatpush.msra.mxu0 %v774
    %850 = vmatpush.msra.mxu0 %v773
    %851 = vmatpush.msra.mxu0 %v772
    %852 = vmatpush.msra.mxu0 %v771
    %853 = vmatpush.msra.mxu0 %v770
    %854 = vmatmul.f32.gmra.mxu0 %v738
    %v855 = vpop.f32.mrf.mxu0
    %v856 = vadd.f32 %v836, %v855
    %857 = vmatmul.f32.gmra.mxu0 %v742
    %v858 = vpop.f32.mrf.mxu0
    %v859 = vadd.f32 %v836, %v858
    %860 = vmatmul.f32.gmra.mxu0 %v746
    %v861 = vpop.f32.mrf.mxu0
    %v862 = vadd.f32 %v836, %v861
    %863 = vmatmul.f32.gmra.mxu0 %v750
    %v864 = vpop.f32.mrf.mxu0
    %v865 = vadd.f32 %v836, %v864
    %866 = vmatmul.f32.gmra.mxu0 %v754
    %v867 = vpop.f32.mrf.mxu0
    %v868 = vadd.f32 %v836, %v867
    %869 = vmatmul.f32.gmra.mxu0 %v758
    %v870 = vpop.f32.mrf.mxu0
    %v871 = vadd.f32 %v836, %v870
    %872 = vmatmul.f32.gmra.mxu0 %v762
    %v873 = vpop.f32.mrf.mxu0
    %v874 = vadd.f32 %v836, %v873
    %875 = vmatmul.f32.gmra.mxu0 %v766
    %v876 = vpop.f32.mrf.mxu0
    %v877 = vadd.f32 %v836, %v876
    %878 = vdwg.mxu0
    %879 = vmatpush.msra.mxu0 %v801
    %880 = vmatpush.msra.mxu0 %v800
    %881 = vmatpush.msra.mxu0 %v799
    %882 = vmatpush.msra.mxu0 %v798
    %883 = vmatpush.msra.mxu0 %v797
    %884 = vmatpush.msra.mxu0 %v796
    %885 = vmatpush.msra.mxu0 %v795
    %886 = vmatpush.msra.mxu0 %v794
    %887 = vmatpush.msra.mxu0 %v793
    %888 = vmatpush.msra.mxu0 %v792
    %889 = vmatpush.msra.mxu0 %v791
    %890 = vmatpush.msra.mxu0 %v790
    %891 = vmatpush.msra.mxu0 %v789
    %892 = vmatpush.msra.mxu0 %v788
    %893 = vmatpush.msra.mxu0 %v787
    %894 = vmatpush.msra.mxu0 %v786
    %895 = vmatmul.f32.gmra.mxu0 %v739
    %v896 = vpop.f32.mrf.mxu0
    %v897 = vadd.f32 %v856, %v896
    %898 = vmatmul.f32.gmra.mxu0 %v743
    %v899 = vpop.f32.mrf.mxu0
    %v900 = vadd.f32 %v859, %v899
    %901 = vmatmul.f32.gmra.mxu0 %v747
    %v902 = vpop.f32.mrf.mxu0
    %v903 = vadd.f32 %v862, %v902
    %904 = vmatmul.f32.gmra.mxu0 %v751
    %v905 = vpop.f32.mrf.mxu0
    %v906 = vadd.f32 %v865, %v905
    %907 = vmatmul.f32.gmra.mxu0 %v755
    %v908 = vpop.f32.mrf.mxu0
    %v909 = vadd.f32 %v868, %v908
    %910 = vmatmul.f32.gmra.mxu0 %v759
    %v911 = vpop.f32.mrf.mxu0
    %v912 = vadd.f32 %v871, %v911
    %913 = vmatmul.f32.gmra.mxu0 %v763
    %v914 = vpop.f32.mrf.mxu0
    %v915 = vadd.f32 %v874, %v914
    %916 = vmatmul.f32.gmra.mxu0 %v767
    %v917 = vpop.f32.mrf.mxu0
    %v918 = vadd.f32 %v877, %v917
    %919 = vdwg.mxu0
    %920 = vmatpush.msra.mxu0 %v817
    %921 = vmatpush.msra.mxu0 %v816
    %922 = vmatpush.msra.mxu0 %v815
    %923 = vmatpush.msra.mxu0 %v814
    %924 = vmatpush.msra.mxu0 %v813
    %925 = vmatpush.msra.mxu0 %v812
    %926 = vmatpush.msra.mxu0 %v811
    %927 = vmatpush.msra.mxu0 %v810
    %928 = vmatpush.msra.mxu0 %v809
    %929 = vmatpush.msra.mxu0 %v808
    %930 = vmatpush.msra.mxu0 %v807
    %931 = vmatpush.msra.mxu0 %v806
    %932 = vmatpush.msra.mxu0 %v805
    %933 = vmatpush.msra.mxu0 %v804
    %934 = vmatpush.msra.mxu0 %v803
    %935 = vmatpush.msra.mxu0 %v802
    %936 = vmatmul.f32.gmra.mxu0 %v740
    %v937 = vpop.f32.mrf.mxu0
    %v938 = vadd.f32 %v897, %v937
    %939 = vmatmul.f32.gmra.mxu0 %v744
    %v940 = vpop.f32.mrf.mxu0
    %v941 = vadd.f32 %v900, %v940
    %942 = vmatmul.f32.gmra.mxu0 %v748
    %v943 = vpop.f32.mrf.mxu0
    %v944 = vadd.f32 %v903, %v943
    %945 = vmatmul.f32.gmra.mxu0 %v752
    %v946 = vpop.f32.mrf.mxu0
    %v947 = vadd.f32 %v906, %v946
    %948 = vmatmul.f32.gmra.mxu0 %v756
    %v949 = vpop.f32.mrf.mxu0
    %v950 = vadd.f32 %v909, %v949
    %951 = vmatmul.f32.gmra.mxu0 %v760
    %v952 = vpop.f32.mrf.mxu0
    %v953 = vadd.f32 %v912, %v952
    %954 = vmatmul.f32.gmra.mxu0 %v764
    %v955 = vpop.f32.mrf.mxu0
    %v956 = vadd.f32 %v915, %v955
    %957 = vmatmul.f32.gmra.mxu0 %v768
    %v958 = vpop.f32.mrf.mxu0
    %v959 = vadd.f32 %v918, %v958
    %960 = vdwg.mxu0
    %961 = vmatpush.msra.mxu0 %v833
    %962 = vmatpush.msra.mxu0 %v832
    %963 = vmatpush.msra.mxu0 %v831
    %964 = vmatpush.msra.mxu0 %v830
    %965 = vmatpush.msra.mxu0 %v829
    %966 = vmatpush.msra.mxu0 %v828
    %967 = vmatpush.msra.mxu0 %v827
    %968 = vmatpush.msra.mxu0 %v826
    %969 = vmatpush.msra.mxu0 %v825
    %970 = vmatpush.msra.mxu0 %v824
    %971 = vmatpush.msra.mxu0 %v823
    %972 = vmatpush.msra.mxu0 %v822
    %973 = vmatpush.msra.mxu0 %v821
    %974 = vmatpush.msra.mxu0 %v820
    %975 = vmatpush.msra.mxu0 %v819
    %976 = vmatpush.msra.mxu0 %v818
    %977 = vmatmul.f32.gmra.mxu0 %v741
    %v978 = vpop.f32.mrf.mxu0
    %v979 = vadd.f32 %v938, %v978
    %980 = vmatmul.f32.gmra.mxu0 %v745
    %v981 = vpop.f32.mrf.mxu0
    %v982 = vadd.f32 %v941, %v981
    %983 = vmatmul.f32.gmra.mxu0 %v749
    %v984 = vpop.f32.mrf.mxu0
    %v985 = vadd.f32 %v944, %v984
    %986 = vmatmul.f32.gmra.mxu0 %v753
    %v987 = vpop.f32.mrf.mxu0
    %v988 = vadd.f32 %v947, %v987
    %989 = vmatmul.f32.gmra.mxu0 %v757
    %v990 = vpop.f32.mrf.mxu0
    %v991 = vadd.f32 %v950, %v990
    %992 = vmatmul.f32.gmra.mxu0 %v761
    %v993 = vpop.f32.mrf.mxu0
    %v994 = vadd.f32 %v953, %v993
    %995 = vmatmul.f32.gmra.mxu0 %v765
    %v996 = vpop.f32.mrf.mxu0
    %v997 = vadd.f32 %v956, %v996
    %998 = vmatmul.f32.gmra.mxu0 %v769
    %v999 = vpop.f32.mrf.mxu0
    %v1000 = vadd.f32 %v959, %v999
    %1001 = vdwg.mxu0
    %v1002 = vadd.f32 %v979, 0.0
    %vm1003 = vcmp.gt.f32.partialorder %v1002, 1.0
    %v1004 = vsel %vm1003, 1, 0
    %v1005 = vcvt.s32.f32 %v1004
    %v1006 = vmul.f32 %v1002, 0.8
    %v1007 = vadd.f32 %v1006, %v982
    %v1008 = vsub.f32 %v1007, %v1005
    %vm1009 = vcmp.gt.f32.partialorder %v1008, 1.0
    %v1010 = vsel %vm1009, 1, 0
    %v1011 = vcvt.s32.f32 %v1010
    %v1012 = vmul.f32 %v1008, 0.8
    %v1013 = vadd.f32 %v1012, %v985
    %v1014 = vsub.f32 %v1013, %v1011
    %vm1015 = vcmp.gt.f32.partialorder %v1014, 1.0
    %v1016 = vsel %vm1015, 1, 0
    %v1017 = vcvt.s32.f32 %v1016
    %v1018 = vmul.f32 %v1014, 0.8
    %v1019 = vadd.f32 %v1018, %v988
    %v1020 = vsub.f32 %v1019, %v1017
    %vm1021 = vcmp.gt.f32.partialorder %v1020, 1.0
    %v1022 = vsel %vm1021, 1, 0
    %v1023 = vcvt.s32.f32 %v1022
    %1025 = vrot.lane.b32.xlu0 %v1011, 32
    %v1026 = vpop.permute.xlu0 %1025
    %1029 = vrot.lane.b32.xlu0 %v1017, 64
    %v1030 = vpop.permute.xlu0 %1029
    %1033 = vrot.lane.b32.xlu0 %v1023, 96
    %v1034 = vpop.permute.xlu0 %1033
    %vm1036 = vcmask 261120
    %v1037 = vsel %vm1036, %v1005, %v1026
    %vm1038 = vcmask 523264
    %v1039 = vsel %vm1038, %v1037, %v1030
    %vm1040 = vcmask 785408
    %v1041 = vsel %vm1040, %v1039, %v1034
    %1042 = vst [vmem:[#allocation6] sm:$0xff] %v1041
    %1044 = vrot.lane.b32.xlu0 %v1008, 32
    %v1045 = vpop.permute.xlu0 %1044
    %1048 = vrot.lane.b32.xlu0 %v1014, 64
    %v1049 = vpop.permute.xlu0 %1048
    %1052 = vrot.lane.b32.xlu0 %v1020, 96
    %v1053 = vpop.permute.xlu0 %1052
    %v1055 = vsel %vm1036, %v1002, %v1045
    %v1056 = vsel %vm1038, %v1055, %v1049
    %v1057 = vsel %vm1040, %v1056, %v1053
    %1058 = vst [vmem:[#allocation7] sm:$0xff] %v1057
    %v1059 = vmul.f32 %v1020, 0.8
    %v1060 = vadd.f32 %v1059, %v991
    %v1061 = vsub.f32 %v1060, %v1023
    %vm1062 = vcmp.gt.f32.partialorder %v1061, 1.0
    %v1063 = vsel %vm1062, 1, 0
    %v1064 = vcvt.s32.f32 %v1063
    %v1065 = vmul.f32 %v1061, 0.8
    %v1066 = vadd.f32 %v1065, %v994
    %v1067 = vsub.f32 %v1066, %v1064
    %vm1068 = vcmp.gt.f32.partialorder %v1067, 1.0
    %v1069 = vsel %vm1068, 1, 0
    %v1070 = vcvt.s32.f32 %v1069
    %v1071 = vmul.f32 %v1067, 0.8
    %v1072 = vadd.f32 %v1071, %v997
    %v1073 = vsub.f32 %v1072, %v1070
    %vm1074 = vcmp.gt.f32.partialorder %v1073, 1.0
    %v1075 = vsel %vm1074, 1, 0
    %v1076 = vcvt.s32.f32 %v1075
    %v1077 = vmul.f32 %v1073, 0.8
    %v1078 = vadd.f32 %v1077, %v1000
    %v1079 = vsub.f32 %v1078, %v1076
    %vm1080 = vcmp.gt.f32.partialorder %v1079, 1.0
    %v1081 = vsel %vm1080, 1, 0
    %v1082 = vcvt.s32.f32 %v1081
    %1084 = vrot.lane.b32.xlu0 %v1070, 32
    %v1085 = vpop.permute.xlu0 %1084
    %1088 = vrot.lane.b32.xlu0 %v1076, 64
    %v1089 = vpop.permute.xlu0 %1088
    %1092 = vrot.lane.b32.xlu0 %v1082, 96
    %v1093 = vpop.permute.xlu0 %1092
    %v1095 = vsel %vm1036, %v1064, %v1085
    %v1096 = vsel %vm1038, %v1095, %v1089
    %v1097 = vsel %vm1040, %v1096, %v1093
    %1098 = vst [vmem:[#allocation6 + $0x8] sm:$0xff] %v1097
    %1100 = vrot.lane.b32.xlu0 %v1067, 32
    %v1101 = vpop.permute.xlu0 %1100
    %1104 = vrot.lane.b32.xlu0 %v1073, 64
    %v1105 = vpop.permute.xlu0 %1104
    %1108 = vrot.lane.b32.xlu0 %v1079, 96
    %v1109 = vpop.permute.xlu0 %1108
    %v1111 = vsel %vm1036, %v1061, %v1101
    %v1112 = vsel %vm1038, %v1111, %v1105
    %v1113 = vsel %vm1040, %v1112, %v1109
    %1114 = vst [vmem:[#allocation7 + $0x8] sm:$0xff] %v1113
    // Predicated region
    $region26: #{tpu_custom_call.1} parent=1 // pred_check
      _
    $region27: #{tpu_custom_call.1} parent=1 // pred_check_branch
      %1116 = sbr.rel (0) target = $region29
    $region28: #{tpu_custom_call.1} parent=1 // pred_region
      %1118 = vsyncadd [#allocation5], 0
      %s1120 = sshll.u32 [#allocation6], 4
      %s1121 = int_to_ptr.vmem [resolvable:$true] %s1120
      %s1122 = sshll.u32 %s5, 4
      %s1123 = int_to_ptr.hbm [resolvable:$true] %s1122
      %1125 = dma.vmem_to_hbm [thread:$0]  %s1121, 256, %s1123, [#allocation5]
    $region29: #{tpu_custom_call.1} parent=1 // pred_fallthru
      _
    // Predicated region
    $region30: #{tpu_custom_call.1} parent=1 // pred_check
      _
    $region31: #{tpu_custom_call.1} parent=1 // pred_check_branch
      %1127 = sbr.rel (0) target = $region33
    $region32: #{tpu_custom_call.1} parent=1 // pred_region
      %1129 = vsyncadd [#allocation8], 0
      %s1131 = sshll.u32 [#allocation7], 4
      %s1132 = int_to_ptr.vmem [resolvable:$true] %s1131
      %s1133 = sshll.u32 %s6, 4
      %s1134 = int_to_ptr.hbm [resolvable:$true] %s1133
      %1136 = dma.vmem_to_hbm [thread:$0]  %s1132, 256, %s1134, [#allocation8]
    $region33: #{tpu_custom_call.1} parent=1 // pred_fallthru
      _
    // Predicated region
    $region34: #{tpu_custom_call.1} parent=1 // pred_check
      _
    $region35: #{tpu_custom_call.1} parent=1 // pred_check_branch
      %1138 = sbr.rel (0) target = $region37
    $region36: #{tpu_custom_call.1} parent=1 // pred_region
      %1140 = dma.done [#allocation5], 256
    $region37: #{tpu_custom_call.1} parent=1 // pred_fallthru
      _
    // Predicated region
    $region38: #{tpu_custom_call.1} parent=1 // pred_check
      _
    $region39: #{tpu_custom_call.1} parent=1 // pred_check_branch
      %1142 = sbr.rel (0) target = $region41
    $region40: #{tpu_custom_call.1} parent=1 // pred_region
      %1144 = dma.done [#allocation8], 256
    $region41: #{tpu_custom_call.1} parent=1 // pred_fallthru
      _
    %1145 = vsyncpa [#allocation4], 1
    %1146 = vsyncpa [#allocation5], 1
    %1147 = vsyncpa [#allocation8], 1

</llo_original>
